<compile_context>
chip_gen: v7x
topology: tpu7x:2x2x1
jax: 0.10.0
libtpu: 0.0.40
codegen_flags: <defaults>
</compile_context>

<pallas_src>
import functools

import jax
import jax.numpy as jnp
import numpy as np
from jax import lax
from jax.experimental import pallas as pl
from jax.experimental.pallas import tpu as pltpu

LANE = 128
SUBLANE = 8


def _round_up(x, m):
    return (x + m - 1) // m * m


def lstm_classifier_kernel(n_tags, ids_ref, proj_ref, w_hh_ref, w_out_ref,
                           b_out_ref, out_ref):
    """Fused token gather + LSTM recurrence + linear head + log-softmax.

    ids_ref:   (seq,)      int32 token ids                      (SMEM)
    proj_ref:  (Vp, 4*Hp)  precomputed emb @ w_ih.T + b_ih+b_hh (VMEM, gate-padded)
    w_hh_ref:  (Hp, 4*Hp)  recurrent weights, transposed + gate-padded
    w_out_ref: (Hp, Tp)    hidden2tag weights, transposed + zero-padded
    b_out_ref: (1, Tp)     hidden2tag bias, zero-padded
    out_ref:   (1, Tp)     log-softmax scores (lane-dense; pad lanes ~ -1e30)
    """
    seq = ids_ref.shape[0]
    Hp = w_hh_ref.shape[0]

    w_hh = w_hh_ref[...]                         # hoisted: loaded once
    h = jnp.zeros((1, Hp), jnp.float32)
    c = jnp.zeros((1, Hp), jnp.float32)

    # seq is small & static -> full unroll so LLO sees the whole serial chain.
    # TODO(synk): for long sequences switch to lax.fori_loop(..., unroll=4-8).
    for t in range(seq):
        # In-kernel gather of the precomputed per-token projection row.
        xg = proj_ref[pl.ds(ids_ref[t], 1), :]                  # (1, 4*Hp)
        gates = xg + jnp.dot(h, w_hh, preferred_element_type=jnp.float32)
        # Gate blocks are 128-lane aligned -> plain lane-group selects,
        # no cross-lane shuffles. PyTorch gate order: i, f, g, o.
        i_g = jax.nn.sigmoid(gates[:, 0 * Hp:1 * Hp])
        f_g = jax.nn.sigmoid(gates[:, 1 * Hp:2 * Hp])
        g_g = jnp.tanh(gates[:, 2 * Hp:3 * Hp])
        o_g = jax.nn.sigmoid(gates[:, 3 * Hp:4 * Hp])
        c = f_g * c + i_g * g_g
        h = o_g * jnp.tanh(c)

    # hidden2tag into a lane-dense (1, Tp) vreg: (1,Hp) @ (Hp,Tp) + (1,Tp)
    tag = (jnp.dot(h, w_out_ref[...], preferred_element_type=jnp.float32)
           + b_out_ref[...])
    lane = lax.broadcasted_iota(jnp.int32, tag.shape, 1)
    tag = jnp.where(lane < n_tags, tag, jnp.float32(-1e30))    # mask pad lanes

    # LogSoftmax(dim=1), numerically stable; pad lanes contribute exp(...) = 0.
    m = jnp.max(tag, axis=1, keepdims=True)
    z = tag - m
    lse = jnp.log(jnp.sum(jnp.exp(z), axis=1, keepdims=True))
    out_ref[...] = z - lse


def prepare_kernel_params(params):
    """One-time host-side prep (NOT on the per-call path):
    fold embedding + input projection (+ both biases) into a gather table,
    pre-transpose and zero-pad all weights to 128-lane-aligned gate blocks."""
    emb = params["embedding"].astype(jnp.float32)
    V, _ = emb.shape
    H = params["w_hh"].shape[1]
    T = params["w_out"].shape[0]
    Hp = _round_up(H, LANE)
    Tp = _round_up(T, LANE)
    Vp = _round_up(V, SUBLANE)

    # proj[v] = emb[v] @ w_ih.T + (b_ih + b_hh)   -> (V, 4H), gate order i,f,g,o
    proj = emb @ params["w_ih"].T + (params["b_ih"] + params["b_hh"])
    w_hh_t = params["w_hh"].T                                      # (H, 4H)

    proj_pad = jnp.zeros((Vp, 4 * Hp), jnp.float32)
    w_hh_pad = jnp.zeros((Hp, 4 * Hp), jnp.float32)
    for k in range(4):
        proj_pad = proj_pad.at[:V, k * Hp:k * Hp + H].set(
            proj[:, k * H:(k + 1) * H])
        w_hh_pad = w_hh_pad.at[:H, k * Hp:k * Hp + H].set(
            w_hh_t[:, k * H:(k + 1) * H])

    w_out_pad = jnp.zeros((Hp, Tp), jnp.float32).at[:H, :T].set(
        params["w_out"].T)
    b_out_pad = jnp.zeros((1, Tp), jnp.float32).at[0, :T].set(params["b_out"])

    return {
        "proj": proj_pad,        # (Vp, 4*Hp)
        "w_hh": w_hh_pad,        # (Hp, 4*Hp)
        "w_out": w_out_pad,      # (Hp, Tp)
        "b_out": b_out_pad,      # (1, Tp)
        "n_tags": int(T),        # static
    }


def lstm_classifier_forward(sentence, kparams):
    """Single fused pallas_call; only a tiny final slice runs outside."""
    n_tags = kparams["n_tags"]
    Tp = kparams["b_out"].shape[1]
    smem = pl.BlockSpec(memory_space=pltpu.MemorySpace.SMEM)
    vmem = pl.BlockSpec(memory_space=pltpu.MemorySpace.VMEM)
    out_padded = pl.pallas_call(
        functools.partial(lstm_classifier_kernel, n_tags),
        out_shape=jax.ShapeDtypeStruct((1, Tp), jnp.float32),
        in_specs=[smem, vmem, vmem, vmem, vmem],
        out_specs=vmem,
    )(sentence.astype(jnp.int32), kparams["proj"], kparams["w_hh"],
      kparams["w_out"], kparams["b_out"])
    return out_padded[:, :n_tags]


def reference_forward(sentence, params):
    """Pure-JAX reference of the PyTorch forward for verification."""
    emb = jnp.take(params["embedding"], sentence, axis=0)
    H = params["w_hh"].shape[1]
    h = jnp.zeros((1, H), jnp.float32)
    c = jnp.zeros((1, H), jnp.float32)
    for t in range(emb.shape[0]):
        gates = (emb[t:t + 1] @ params["w_ih"].T + params["b_ih"]
                 + h @ params["w_hh"].T + params["b_hh"])
        i_g = jax.nn.sigmoid(gates[:, 0 * H:1 * H])
        f_g = jax.nn.sigmoid(gates[:, 1 * H:2 * H])
        g_g = jnp.tanh(gates[:, 2 * H:3 * H])
        o_g = jax.nn.sigmoid(gates[:, 3 * H:4 * H])
        c = f_g * c + i_g * g_g
        h = o_g * jnp.tanh(c)
    tag = h @ params["w_out"].T + params["b_out"][None, :]
    return jax.nn.log_softmax(tag, axis=1)


def init_params(key, vocab_size, embedding_dim, hidden_dim, tagset_size):
    ks = jax.random.split(key, 7)
    s_lstm = 1.0 / np.sqrt(hidden_dim)
    s_lin = 1.0 / np.sqrt(hidden_dim)
    u = lambda k, shape, s: jax.random.uniform(k, shape, jnp.float32, -s, s)
    return {
        "embedding": jax.random.normal(ks[0], (vocab_size, embedding_dim),
                                       jnp.float32),
        # PyTorch gate order along 4H axis: [i, f, g, o]
        "w_ih": u(ks[1], (4 * hidden_dim, embedding_dim), s_lstm),
        "w_hh": u(ks[2], (4 * hidden_dim, hidden_dim), s_lstm),
        "b_ih": u(ks[3], (4 * hidden_dim,), s_lstm),
        "b_hh": u(ks[4], (4 * hidden_dim,), s_lstm),
        "w_out": u(ks[5], (tagset_size, hidden_dim), s_lin),
        "b_out": u(ks[6], (tagset_size,), s_lin),
    }


if __name__ == "__main__":
    EMBEDDING_DIM = 32
    HIDDEN_DIM = 32
    VOCAB_SIZE = 50
    TAGSET_SIZE = 5
    SEQ_LEN = 8

    key = jax.random.PRNGKey(0)
    pkey, skey = jax.random.split(key)
    params = init_params(pkey, VOCAB_SIZE, EMBEDDING_DIM, HIDDEN_DIM,
                         TAGSET_SIZE)
    sentence = jax.random.randint(skey, (SEQ_LEN,), 0, VOCAB_SIZE, jnp.int32)

    kparams = prepare_kernel_params(params)       # one-time host-side prep

    out = lstm_classifier_forward(sentence, kparams)
    out = jax.block_until_ready(out)

    ref = reference_forward(sentence, params)
    np.testing.assert_allclose(np.asarray(out), np.asarray(ref),
                               rtol=1e-5, atol=1e-5)
    assert out.shape == (1, TAGSET_SIZE)
    print("KERNEL_OK")
</pallas_src>

<mosaic_0001>
module attributes {stable_mosaic.version = 11 : i64} {
  func.func @lstm_classifier_kernel(%arg0: memref<8xi32, #tpu.memory_space<smem>>, %arg1: memref<56x512xf32, #tpu.memory_space<vmem>>, %arg2: memref<128x512xf32, #tpu.memory_space<vmem>>, %arg3: memref<128x128xf32, #tpu.memory_space<vmem>>, %arg4: memref<1x128xf32, #tpu.memory_space<vmem>>, %arg5: memref<1x128xf32, #tpu.memory_space<vmem>>) attributes {dimension_semantics = [], scalar_prefetch = 0 : i64, scratch_operands = 0 : i64, tpu.core_type = #tpu.core_type<tc>} {
    %c0 = arith.constant 0 : index
    %c0_0 = arith.constant 0 : index
    %0 = vector.load %arg2[%c0, %c0_0] : memref<128x512xf32, #tpu.memory_space<vmem>>, vector<128x512xf32>
    %cst = arith.constant 0.000000e+00 : f32
    %1 = vector.broadcast %cst : f32 to vector<1x128xf32>
    %cst_1 = arith.constant 0.000000e+00 : f32
    %2 = vector.broadcast %cst_1 : f32 to vector<1x128xf32>
    %c0_2 = arith.constant 0 : index
    %3 = memref.load %arg0[%c0_2] : memref<8xi32, #tpu.memory_space<smem>>
    %4 = arith.index_cast %3 : i32 to index
    %c0_3 = arith.constant 0 : index
    %5 = vector.load %arg1[%4, %c0_3] : memref<56x512xf32, #tpu.memory_space<vmem>>, vector<1x512xf32>
    %cst_4 = arith.constant dense<0.000000e+00> : vector<1x512xf32>
    %6 = tpu.matmul %1, %0, %cst_4 {dimension_numbers = #tpu.dot_dimension_numbers<[1], [0], [0], [1], [0, 0, 1, 1], [], []>} : vector<1x128xf32>, vector<128x512xf32>, vector<1x512xf32> -> vector<1x512xf32>
    %7 = arith.addf %5, %6 : vector<1x512xf32>
    %8 = vector.extract_strided_slice %7 {offsets = [0, 0], sizes = [1, 128], strides = [1, 1]} : vector<1x512xf32> to vector<1x128xf32>
    %9 = arith.negf %8 : vector<1x128xf32>
    %10 = math.exp %9 : vector<1x128xf32>
    %cst_5 = arith.constant 1.000000e+00 : f32
    %11 = vector.broadcast %cst_5 : f32 to vector<1x128xf32>
    %12 = arith.addf %11, %10 : vector<1x128xf32>
    %13 = arith.divf %11, %12 : vector<1x128xf32>
    %14 = vector.extract_strided_slice %7 {offsets = [0, 128], sizes = [1, 128], strides = [1, 1]} : vector<1x512xf32> to vector<1x128xf32>
    %15 = arith.negf %14 : vector<1x128xf32>
    %16 = math.exp %15 : vector<1x128xf32>
    %cst_6 = arith.constant 1.000000e+00 : f32
    %17 = vector.broadcast %cst_6 : f32 to vector<1x128xf32>
    %18 = arith.addf %17, %16 : vector<1x128xf32>
    %19 = arith.divf %17, %18 : vector<1x128xf32>
    %20 = vector.extract_strided_slice %7 {offsets = [0, 256], sizes = [1, 128], strides = [1, 1]} : vector<1x512xf32> to vector<1x128xf32>
    %21 = math.tanh %20 : vector<1x128xf32>
    %22 = vector.extract_strided_slice %7 {offsets = [0, 384], sizes = [1, 128], strides = [1, 1]} : vector<1x512xf32> to vector<1x128xf32>
    %23 = arith.negf %22 : vector<1x128xf32>
    %24 = math.exp %23 : vector<1x128xf32>
    %cst_7 = arith.constant 1.000000e+00 : f32
    %25 = vector.broadcast %cst_7 : f32 to vector<1x128xf32>
    %26 = arith.addf %25, %24 : vector<1x128xf32>
    %27 = arith.divf %25, %26 : vector<1x128xf32>
    %28 = arith.mulf %19, %2 : vector<1x128xf32>
    %29 = arith.mulf %13, %21 : vector<1x128xf32>
    %30 = arith.addf %28, %29 : vector<1x128xf32>
    %31 = math.tanh %30 : vector<1x128xf32>
    %32 = arith.mulf %27, %31 : vector<1x128xf32>
    %c1 = arith.constant 1 : index
    %33 = memref.load %arg0[%c1] : memref<8xi32, #tpu.memory_space<smem>>
    %34 = arith.index_cast %33 : i32 to index
    %c0_8 = arith.constant 0 : index
    %35 = vector.load %arg1[%34, %c0_8] : memref<56x512xf32, #tpu.memory_space<vmem>>, vector<1x512xf32>
    %cst_9 = arith.constant dense<0.000000e+00> : vector<1x512xf32>
    %36 = tpu.matmul %32, %0, %cst_9 {dimension_numbers = #tpu.dot_dimension_numbers<[1], [0], [0], [1], [0, 0, 1, 1], [], []>} : vector<1x128xf32>, vector<128x512xf32>, vector<1x512xf32> -> vector<1x512xf32>
    %37 = arith.addf %35, %36 : vector<1x512xf32>
    %38 = vector.extract_strided_slice %37 {offsets = [0, 0], sizes = [1, 128], strides = [1, 1]} : vector<1x512xf32> to vector<1x128xf32>
    %39 = arith.negf %38 : vector<1x128xf32>
    %40 = math.exp %39 : vector<1x128xf32>
    %cst_10 = arith.constant 1.000000e+00 : f32
    %41 = vector.broadcast %cst_10 : f32 to vector<1x128xf32>
    %42 = arith.addf %41, %40 : vector<1x128xf32>
    %43 = arith.divf %41, %42 : vector<1x128xf32>
    %44 = vector.extract_strided_slice %37 {offsets = [0, 128], sizes = [1, 128], strides = [1, 1]} : vector<1x512xf32> to vector<1x128xf32>
    %45 = arith.negf %44 : vector<1x128xf32>
    %46 = math.exp %45 : vector<1x128xf32>
    %cst_11 = arith.constant 1.000000e+00 : f32
    %47 = vector.broadcast %cst_11 : f32 to vector<1x128xf32>
    %48 = arith.addf %47, %46 : vector<1x128xf32>
    %49 = arith.divf %47, %48 : vector<1x128xf32>
    %50 = vector.extract_strided_slice %37 {offsets = [0, 256], sizes = [1, 128], strides = [1, 1]} : vector<1x512xf32> to vector<1x128xf32>
    %51 = math.tanh %50 : vector<1x128xf32>
    %52 = vector.extract_strided_slice %37 {offsets = [0, 384], sizes = [1, 128], strides = [1, 1]} : vector<1x512xf32> to vector<1x128xf32>
    %53 = arith.negf %52 : vector<1x128xf32>
    %54 = math.exp %53 : vector<1x128xf32>
    %cst_12 = arith.constant 1.000000e+00 : f32
    %55 = vector.broadcast %cst_12 : f32 to vector<1x128xf32>
    %56 = arith.addf %55, %54 : vector<1x128xf32>
    %57 = arith.divf %55, %56 : vector<1x128xf32>
    %58 = arith.mulf %49, %30 : vector<1x128xf32>
    %59 = arith.mulf %43, %51 : vector<1x128xf32>
    %60 = arith.addf %58, %59 : vector<1x128xf32>
    %61 = math.tanh %60 : vector<1x128xf32>
    %62 = arith.mulf %57, %61 : vector<1x128xf32>
    %c2 = arith.constant 2 : index
    %63 = memref.load %arg0[%c2] : memref<8xi32, #tpu.memory_space<smem>>
    %64 = arith.index_cast %63 : i32 to index
    %c0_13 = arith.constant 0 : index
    %65 = vector.load %arg1[%64, %c0_13] : memref<56x512xf32, #tpu.memory_space<vmem>>, vector<1x512xf32>
    %cst_14 = arith.constant dense<0.000000e+00> : vector<1x512xf32>
    %66 = tpu.matmul %62, %0, %cst_14 {dimension_numbers = #tpu.dot_dimension_numbers<[1], [0], [0], [1], [0, 0, 1, 1], [], []>} : vector<1x128xf32>, vector<128x512xf32>, vector<1x512xf32> -> vector<1x512xf32>
    %67 = arith.addf %65, %66 : vector<1x512xf32>
    %68 = vector.extract_strided_slice %67 {offsets = [0, 0], sizes = [1, 128], strides = [1, 1]} : vector<1x512xf32> to vector<1x128xf32>
    %69 = arith.negf %68 : vector<1x128xf32>
    %70 = math.exp %69 : vector<1x128xf32>
    %cst_15 = arith.constant 1.000000e+00 : f32
    %71 = vector.broadcast %cst_15 : f32 to vector<1x128xf32>
    %72 = arith.addf %71, %70 : vector<1x128xf32>
    %73 = arith.divf %71, %72 : vector<1x128xf32>
    %74 = vector.extract_strided_slice %67 {offsets = [0, 128], sizes = [1, 128], strides = [1, 1]} : vector<1x512xf32> to vector<1x128xf32>
    %75 = arith.negf %74 : vector<1x128xf32>
    %76 = math.exp %75 : vector<1x128xf32>
    %cst_16 = arith.constant 1.000000e+00 : f32
    %77 = vector.broadcast %cst_16 : f32 to vector<1x128xf32>
    %78 = arith.addf %77, %76 : vector<1x128xf32>
    %79 = arith.divf %77, %78 : vector<1x128xf32>
    %80 = vector.extract_strided_slice %67 {offsets = [0, 256], sizes = [1, 128], strides = [1, 1]} : vector<1x512xf32> to vector<1x128xf32>
    %81 = math.tanh %80 : vector<1x128xf32>
    %82 = vector.extract_strided_slice %67 {offsets = [0, 384], sizes = [1, 128], strides = [1, 1]} : vector<1x512xf32> to vector<1x128xf32>
    %83 = arith.negf %82 : vector<1x128xf32>
    %84 = math.exp %83 : vector<1x128xf32>
    %cst_17 = arith.constant 1.000000e+00 : f32
    %85 = vector.broadcast %cst_17 : f32 to vector<1x128xf32>
    %86 = arith.addf %85, %84 : vector<1x128xf32>
    %87 = arith.divf %85, %86 : vector<1x128xf32>
    %88 = arith.mulf %79, %60 : vector<1x128xf32>
    %89 = arith.mulf %73, %81 : vector<1x128xf32>
    %90 = arith.addf %88, %89 : vector<1x128xf32>
    %91 = math.tanh %90 : vector<1x128xf32>
    %92 = arith.mulf %87, %91 : vector<1x128xf32>
    %c3 = arith.constant 3 : index
    %93 = memref.load %arg0[%c3] : memref<8xi32, #tpu.memory_space<smem>>
    %94 = arith.index_cast %93 : i32 to index
    %c0_18 = arith.constant 0 : index
    %95 = vector.load %arg1[%94, %c0_18] : memref<56x512xf32, #tpu.memory_space<vmem>>, vector<1x512xf32>
    %cst_19 = arith.constant dense<0.000000e+00> : vector<1x512xf32>
    %96 = tpu.matmul %92, %0, %cst_19 {dimension_numbers = #tpu.dot_dimension_numbers<[1], [0], [0], [1], [0, 0, 1, 1], [], []>} : vector<1x128xf32>, vector<128x512xf32>, vector<1x512xf32> -> vector<1x512xf32>
    %97 = arith.addf %95, %96 : vector<1x512xf32>
    %98 = vector.extract_strided_slice %97 {offsets = [0, 0], sizes = [1, 128], strides = [1, 1]} : vector<1x512xf32> to vector<1x128xf32>
    %99 = arith.negf %98 : vector<1x128xf32>
    %100 = math.exp %99 : vector<1x128xf32>
    %cst_20 = arith.constant 1.000000e+00 : f32
    %101 = vector.broadcast %cst_20 : f32 to vector<1x128xf32>
    %102 = arith.addf %101, %100 : vector<1x128xf32>
    %103 = arith.divf %101, %102 : vector<1x128xf32>
    %104 = vector.extract_strided_slice %97 {offsets = [0, 128], sizes = [1, 128], strides = [1, 1]} : vector<1x512xf32> to vector<1x128xf32>
    %105 = arith.negf %104 : vector<1x128xf32>
    %106 = math.exp %105 : vector<1x128xf32>
    %cst_21 = arith.constant 1.000000e+00 : f32
    %107 = vector.broadcast %cst_21 : f32 to vector<1x128xf32>
    %108 = arith.addf %107, %106 : vector<1x128xf32>
    %109 = arith.divf %107, %108 : vector<1x128xf32>
    %110 = vector.extract_strided_slice %97 {offsets = [0, 256], sizes = [1, 128], strides = [1, 1]} : vector<1x512xf32> to vector<1x128xf32>
    %111 = math.tanh %110 : vector<1x128xf32>
    %112 = vector.extract_strided_slice %97 {offsets = [0, 384], sizes = [1, 128], strides = [1, 1]} : vector<1x512xf32> to vector<1x128xf32>
    %113 = arith.negf %112 : vector<1x128xf32>
    %114 = math.exp %113 : vector<1x128xf32>
    %cst_22 = arith.constant 1.000000e+00 : f32
    %115 = vector.broadcast %cst_22 : f32 to vector<1x128xf32>
    %116 = arith.addf %115, %114 : vector<1x128xf32>
    %117 = arith.divf %115, %116 : vector<1x128xf32>
    %118 = arith.mulf %109, %90 : vector<1x128xf32>
    %119 = arith.mulf %103, %111 : vector<1x128xf32>
    %120 = arith.addf %118, %119 : vector<1x128xf32>
    %121 = math.tanh %120 : vector<1x128xf32>
    %122 = arith.mulf %117, %121 : vector<1x128xf32>
    %c4 = arith.constant 4 : index
    %123 = memref.load %arg0[%c4] : memref<8xi32, #tpu.memory_space<smem>>
    %124 = arith.index_cast %123 : i32 to index
    %c0_23 = arith.constant 0 : index
    %125 = vector.load %arg1[%124, %c0_23] : memref<56x512xf32, #tpu.memory_space<vmem>>, vector<1x512xf32>
    %cst_24 = arith.constant dense<0.000000e+00> : vector<1x512xf32>
    %126 = tpu.matmul %122, %0, %cst_24 {dimension_numbers = #tpu.dot_dimension_numbers<[1], [0], [0], [1], [0, 0, 1, 1], [], []>} : vector<1x128xf32>, vector<128x512xf32>, vector<1x512xf32> -> vector<1x512xf32>
    %127 = arith.addf %125, %126 : vector<1x512xf32>
    %128 = vector.extract_strided_slice %127 {offsets = [0, 0], sizes = [1, 128], strides = [1, 1]} : vector<1x512xf32> to vector<1x128xf32>
    %129 = arith.negf %128 : vector<1x128xf32>
    %130 = math.exp %129 : vector<1x128xf32>
    %cst_25 = arith.constant 1.000000e+00 : f32
    %131 = vector.broadcast %cst_25 : f32 to vector<1x128xf32>
    %132 = arith.addf %131, %130 : vector<1x128xf32>
    %133 = arith.divf %131, %132 : vector<1x128xf32>
    %134 = vector.extract_strided_slice %127 {offsets = [0, 128], sizes = [1, 128], strides = [1, 1]} : vector<1x512xf32> to vector<1x128xf32>
    %135 = arith.negf %134 : vector<1x128xf32>
    %136 = math.exp %135 : vector<1x128xf32>
    %cst_26 = arith.constant 1.000000e+00 : f32
    %137 = vector.broadcast %cst_26 : f32 to vector<1x128xf32>
    %138 = arith.addf %137, %136 : vector<1x128xf32>
    %139 = arith.divf %137, %138 : vector<1x128xf32>
    %140 = vector.extract_strided_slice %127 {offsets = [0, 256], sizes = [1, 128], strides = [1, 1]} : vector<1x512xf32> to vector<1x128xf32>
    %141 = math.tanh %140 : vector<1x128xf32>
    %142 = vector.extract_strided_slice %127 {offsets = [0, 384], sizes = [1, 128], strides = [1, 1]} : vector<1x512xf32> to vector<1x128xf32>
    %143 = arith.negf %142 : vector<1x128xf32>
    %144 = math.exp %143 : vector<1x128xf32>
    %cst_27 = arith.constant 1.000000e+00 : f32
    %145 = vector.broadcast %cst_27 : f32 to vector<1x128xf32>
    %146 = arith.addf %145, %144 : vector<1x128xf32>
    %147 = arith.divf %145, %146 : vector<1x128xf32>
    %148 = arith.mulf %139, %120 : vector<1x128xf32>
    %149 = arith.mulf %133, %141 : vector<1x128xf32>
    %150 = arith.addf %148, %149 : vector<1x128xf32>
    %151 = math.tanh %150 : vector<1x128xf32>
    %152 = arith.mulf %147, %151 : vector<1x128xf32>
    %c5 = arith.constant 5 : index
    %153 = memref.load %arg0[%c5] : memref<8xi32, #tpu.memory_space<smem>>
    %154 = arith.index_cast %153 : i32 to index
    %c0_28 = arith.constant 0 : index
    %155 = vector.load %arg1[%154, %c0_28] : memref<56x512xf32, #tpu.memory_space<vmem>>, vector<1x512xf32>
    %cst_29 = arith.constant dense<0.000000e+00> : vector<1x512xf32>
    %156 = tpu.matmul %152, %0, %cst_29 {dimension_numbers = #tpu.dot_dimension_numbers<[1], [0], [0], [1], [0, 0, 1, 1], [], []>} : vector<1x128xf32>, vector<128x512xf32>, vector<1x512xf32> -> vector<1x512xf32>
    %157 = arith.addf %155, %156 : vector<1x512xf32>
    %158 = vector.extract_strided_slice %157 {offsets = [0, 0], sizes = [1, 128], strides = [1, 1]} : vector<1x512xf32> to vector<1x128xf32>
    %159 = arith.negf %158 : vector<1x128xf32>
    %160 = math.exp %159 : vector<1x128xf32>
    %cst_30 = arith.constant 1.000000e+00 : f32
    %161 = vector.broadcast %cst_30 : f32 to vector<1x128xf32>
    %162 = arith.addf %161, %160 : vector<1x128xf32>
    %163 = arith.divf %161, %162 : vector<1x128xf32>
    %164 = vector.extract_strided_slice %157 {offsets = [0, 128], sizes = [1, 128], strides = [1, 1]} : vector<1x512xf32> to vector<1x128xf32>
    %165 = arith.negf %164 : vector<1x128xf32>
    %166 = math.exp %165 : vector<1x128xf32>
    %cst_31 = arith.constant 1.000000e+00 : f32
    %167 = vector.broadcast %cst_31 : f32 to vector<1x128xf32>
    %168 = arith.addf %167, %166 : vector<1x128xf32>
    %169 = arith.divf %167, %168 : vector<1x128xf32>
    %170 = vector.extract_strided_slice %157 {offsets = [0, 256], sizes = [1, 128], strides = [1, 1]} : vector<1x512xf32> to vector<1x128xf32>
    %171 = math.tanh %170 : vector<1x128xf32>
    %172 = vector.extract_strided_slice %157 {offsets = [0, 384], sizes = [1, 128], strides = [1, 1]} : vector<1x512xf32> to vector<1x128xf32>
    %173 = arith.negf %172 : vector<1x128xf32>
    %174 = math.exp %173 : vector<1x128xf32>
    %cst_32 = arith.constant 1.000000e+00 : f32
    %175 = vector.broadcast %cst_32 : f32 to vector<1x128xf32>
    %176 = arith.addf %175, %174 : vector<1x128xf32>
    %177 = arith.divf %175, %176 : vector<1x128xf32>
    %178 = arith.mulf %169, %150 : vector<1x128xf32>
    %179 = arith.mulf %163, %171 : vector<1x128xf32>
    %180 = arith.addf %178, %179 : vector<1x128xf32>
    %181 = math.tanh %180 : vector<1x128xf32>
    %182 = arith.mulf %177, %181 : vector<1x128xf32>
    %c6 = arith.constant 6 : index
    %183 = memref.load %arg0[%c6] : memref<8xi32, #tpu.memory_space<smem>>
    %184 = arith.index_cast %183 : i32 to index
    %c0_33 = arith.constant 0 : index
    %185 = vector.load %arg1[%184, %c0_33] : memref<56x512xf32, #tpu.memory_space<vmem>>, vector<1x512xf32>
    %cst_34 = arith.constant dense<0.000000e+00> : vector<1x512xf32>
    %186 = tpu.matmul %182, %0, %cst_34 {dimension_numbers = #tpu.dot_dimension_numbers<[1], [0], [0], [1], [0, 0, 1, 1], [], []>} : vector<1x128xf32>, vector<128x512xf32>, vector<1x512xf32> -> vector<1x512xf32>
    %187 = arith.addf %185, %186 : vector<1x512xf32>
    %188 = vector.extract_strided_slice %187 {offsets = [0, 0], sizes = [1, 128], strides = [1, 1]} : vector<1x512xf32> to vector<1x128xf32>
    %189 = arith.negf %188 : vector<1x128xf32>
    %190 = math.exp %189 : vector<1x128xf32>
    %cst_35 = arith.constant 1.000000e+00 : f32
    %191 = vector.broadcast %cst_35 : f32 to vector<1x128xf32>
    %192 = arith.addf %191, %190 : vector<1x128xf32>
    %193 = arith.divf %191, %192 : vector<1x128xf32>
    %194 = vector.extract_strided_slice %187 {offsets = [0, 128], sizes = [1, 128], strides = [1, 1]} : vector<1x512xf32> to vector<1x128xf32>
    %195 = arith.negf %194 : vector<1x128xf32>
    %196 = math.exp %195 : vector<1x128xf32>
    %cst_36 = arith.constant 1.000000e+00 : f32
    %197 = vector.broadcast %cst_36 : f32 to vector<1x128xf32>
    %198 = arith.addf %197, %196 : vector<1x128xf32>
    %199 = arith.divf %197, %198 : vector<1x128xf32>
    %200 = vector.extract_strided_slice %187 {offsets = [0, 256], sizes = [1, 128], strides = [1, 1]} : vector<1x512xf32> to vector<1x128xf32>
    %201 = math.tanh %200 : vector<1x128xf32>
    %202 = vector.extract_strided_slice %187 {offsets = [0, 384], sizes = [1, 128], strides = [1, 1]} : vector<1x512xf32> to vector<1x128xf32>
    %203 = arith.negf %202 : vector<1x128xf32>
    %204 = math.exp %203 : vector<1x128xf32>
    %cst_37 = arith.constant 1.000000e+00 : f32
    %205 = vector.broadcast %cst_37 : f32 to vector<1x128xf32>
    %206 = arith.addf %205, %204 : vector<1x128xf32>
    %207 = arith.divf %205, %206 : vector<1x128xf32>
    %208 = arith.mulf %199, %180 : vector<1x128xf32>
    %209 = arith.mulf %193, %201 : vector<1x128xf32>
    %210 = arith.addf %208, %209 : vector<1x128xf32>
    %211 = math.tanh %210 : vector<1x128xf32>
    %212 = arith.mulf %207, %211 : vector<1x128xf32>
    %c7 = arith.constant 7 : index
    %213 = memref.load %arg0[%c7] : memref<8xi32, #tpu.memory_space<smem>>
    %214 = arith.index_cast %213 : i32 to index
    %c0_38 = arith.constant 0 : index
    %215 = vector.load %arg1[%214, %c0_38] : memref<56x512xf32, #tpu.memory_space<vmem>>, vector<1x512xf32>
    %cst_39 = arith.constant dense<0.000000e+00> : vector<1x512xf32>
    %216 = tpu.matmul %212, %0, %cst_39 {dimension_numbers = #tpu.dot_dimension_numbers<[1], [0], [0], [1], [0, 0, 1, 1], [], []>} : vector<1x128xf32>, vector<128x512xf32>, vector<1x512xf32> -> vector<1x512xf32>
    %217 = arith.addf %215, %216 : vector<1x512xf32>
    %218 = vector.extract_strided_slice %217 {offsets = [0, 0], sizes = [1, 128], strides = [1, 1]} : vector<1x512xf32> to vector<1x128xf32>
    %219 = arith.negf %218 : vector<1x128xf32>
    %220 = math.exp %219 : vector<1x128xf32>
    %cst_40 = arith.constant 1.000000e+00 : f32
    %221 = vector.broadcast %cst_40 : f32 to vector<1x128xf32>
    %222 = arith.addf %221, %220 : vector<1x128xf32>
    %223 = arith.divf %221, %222 : vector<1x128xf32>
    %224 = vector.extract_strided_slice %217 {offsets = [0, 128], sizes = [1, 128], strides = [1, 1]} : vector<1x512xf32> to vector<1x128xf32>
    %225 = arith.negf %224 : vector<1x128xf32>
    %226 = math.exp %225 : vector<1x128xf32>
    %cst_41 = arith.constant 1.000000e+00 : f32
    %227 = vector.broadcast %cst_41 : f32 to vector<1x128xf32>
    %228 = arith.addf %227, %226 : vector<1x128xf32>
    %229 = arith.divf %227, %228 : vector<1x128xf32>
    %230 = vector.extract_strided_slice %217 {offsets = [0, 256], sizes = [1, 128], strides = [1, 1]} : vector<1x512xf32> to vector<1x128xf32>
    %231 = math.tanh %230 : vector<1x128xf32>
    %232 = vector.extract_strided_slice %217 {offsets = [0, 384], sizes = [1, 128], strides = [1, 1]} : vector<1x512xf32> to vector<1x128xf32>
    %233 = arith.negf %232 : vector<1x128xf32>
    %234 = math.exp %233 : vector<1x128xf32>
    %cst_42 = arith.constant 1.000000e+00 : f32
    %235 = vector.broadcast %cst_42 : f32 to vector<1x128xf32>
    %236 = arith.addf %235, %234 : vector<1x128xf32>
    %237 = arith.divf %235, %236 : vector<1x128xf32>
    %238 = arith.mulf %229, %210 : vector<1x128xf32>
    %239 = arith.mulf %223, %231 : vector<1x128xf32>
    %240 = arith.addf %238, %239 : vector<1x128xf32>
    %241 = math.tanh %240 : vector<1x128xf32>
    %242 = arith.mulf %237, %241 : vector<1x128xf32>
    %c0_43 = arith.constant 0 : index
    %c0_44 = arith.constant 0 : index
    %243 = vector.load %arg3[%c0_43, %c0_44] : memref<128x128xf32, #tpu.memory_space<vmem>>, vector<128x128xf32>
    %cst_45 = arith.constant dense<0.000000e+00> : vector<1x128xf32>
    %244 = tpu.matmul %242, %243, %cst_45 {dimension_numbers = #tpu.dot_dimension_numbers<[1], [0], [0], [1], [0, 0, 1, 1], [], []>} : vector<1x128xf32>, vector<128x128xf32>, vector<1x128xf32> -> vector<1x128xf32>
    %c0_46 = arith.constant 0 : index
    %c0_47 = arith.constant 0 : index
    %245 = vector.load %arg4[%c0_46, %c0_47] : memref<1x128xf32, #tpu.memory_space<vmem>>, vector<1x128xf32>
    %246 = arith.addf %244, %245 : vector<1x128xf32>
    %247 = tpu.iota {dimensions = array<i32: 1>} : vector<1x128xi32>
    %c5_i32 = arith.constant 5 : i32
    %248 = vector.broadcast %c5_i32 : i32 to vector<1x128xi32>
    %249 = arith.cmpi slt, %247, %248 : vector<1x128xi32>
    %cst_48 = arith.constant -1.000000e+30 : f32
    %250 = vector.broadcast %cst_48 : f32 to vector<1x128xf32>
    %251 = arith.select %249, %246, %250 : vector<1x128xi1>, vector<1x128xf32>
    %cst_49 = arith.constant dense<0xFF800000> : vector<1xf32>
    %252 = vector.multi_reduction <maximumf>, %251, %cst_49 [1] : vector<1x128xf32> to vector<1xf32>
    %253 = vector.shape_cast %252 : vector<1xf32> to vector<1x1xf32>
    %254 = vector.broadcast %253 : vector<1x1xf32> to vector<1x128xf32>
    %255 = arith.subf %251, %254 : vector<1x128xf32>
    %256 = math.exp %255 : vector<1x128xf32>
    %cst_50 = arith.constant dense<0.000000e+00> : vector<1xf32>
    %257 = vector.multi_reduction <add>, %256, %cst_50 [1] : vector<1x128xf32> to vector<1xf32>
    %258 = vector.shape_cast %257 : vector<1xf32> to vector<1x1xf32>
    %259 = math.log %258 : vector<1x1xf32>
    %260 = vector.broadcast %259 : vector<1x1xf32> to vector<1x128xf32>
    %261 = arith.subf %255, %260 : vector<1x128xf32>
    %c0_51 = arith.constant 0 : index
    %c0_52 = arith.constant 0 : index
    %262 = vector.load %arg5[%c0_51, %c0_52] : memref<1x128xf32, #tpu.memory_space<vmem>>, vector<1x128xf32>
    tpu.vector_store %arg5[%c0_51, %c0_52], %261 {strides = array<i32>} : memref<1x128xf32, #tpu.memory_space<vmem>>, vector<1x128xf32>,
    return
  }
}

</mosaic_0001>

<llo_original>
// kernel: tpu_custom_call.1
$region0: #{tpu_custom_call.1}
  #allocation0 [shape = 'u32[]', space=smem, size = 0x4, offset = 0x4, fixed_abs, tag = 'smem constant byte address 0x4 - core index']
  #allocation1 [shape = 'u32[144,128]{1,0:T(1,128)}', space=vmem, size = 0x12000, scoped, tag = 'internal scratch']
  %s0 = inlined_call_operand.hbm [shape: s32[8], index: 0, kind: input, shape index: {}]
  %s1 = inlined_call_operand.hbm [shape: f32[56,512], index: 1, kind: input, shape index: {}]
  %s2 = inlined_call_operand.hbm [shape: f32[128,512], index: 2, kind: input, shape index: {}]
  %s3 = inlined_call_operand.hbm [shape: f32[128,128], index: 3, kind: input, shape index: {}]
  %s4 = inlined_call_operand.vmem [shape: f32[1,128], index: 4, kind: input, shape index: {}]
  %s5 = inlined_call_operand.hbm [shape: f32[1,128], index: 5, kind: output, shape index: {}]
  %s6 = sld [smem:[#allocation0]]
  $region46: #{tpu_custom_call.1} parent=0
    _
  %s8 = ssub.s32 1, %s6
  %s9 = scalar_select 0, %s8, %s6
  $region1: #{tpu_custom_call.1} parent=0
    #allocation2 [shape = 'u8[512]{0}', space=smem, size = 0x200, scoped, tag = 'input window, operand 0, single buffered']
    #allocation3 [shape = 's32[1]{0}', space=sflag, size = 0x4, scoped, tag = 'scoped memory for tpu_custom_call.1']
    #allocation4 [shape = 's32[1]{0}', space=sflag, size = 0x4, scoped, tag = 'scoped memory for tpu_custom_call.1']
    #allocation5 [shape = 's32[1]{0}', space=sflag, size = 0x4, scoped, tag = 'scoped memory for tpu_custom_call.1']
    #allocation6 [shape = 'u8[114688]{0}', space=vmem, size = 0x1c000, scoped, tag = 'input window, operand 1, single buffered']
    #allocation7 [shape = 'u8[262144]{0}', space=vmem, size = 0x40000, scoped, tag = 'input window, operand 2, single buffered']
    #allocation8 [shape = 's32[1]{0}', space=sflag, size = 0x4, scoped, tag = 'scoped memory for tpu_custom_call.1']
    #allocation9 [shape = 'u8[65536]{0}', space=vmem, size = 0x10000, scoped, tag = 'input window, operand 3, single buffered']
    #allocation10 [shape = 'u8[512]{0}', space=vmem, size = 0x400, scoped, tag = 'output window, operand 0, single buffered']
    %10 = vsyncpa [#allocation5], 0
    %11 = vsyncpa [#allocation3], 0
    %12 = vsyncpa [#allocation8], 0
    %13 = vsyncpa [#allocation4], 0
    // Predicated region
    $region2: #{tpu_custom_call.1} parent=1 // pred_check
      _
    $region3: #{tpu_custom_call.1} parent=1 // pred_check_branch
      %15 = sbr.rel (0) target = $region5
    $region4: #{tpu_custom_call.1} parent=1 // pred_region
      %s17 = ssub.s32 16, 16
      %18 = vsyncadd [#allocation5], %s17
      %21 = dma.hbm_to_smem %s0, 16, [#allocation2], [#allocation5]
    $region5: #{tpu_custom_call.1} parent=1 // pred_fallthru
      _
    // Predicated region
    $region6: #{tpu_custom_call.1} parent=1 // pred_check
      _
    $region7: #{tpu_custom_call.1} parent=1 // pred_check_branch
      %23 = sbr.rel (0) target = $region9
    $region8: #{tpu_custom_call.1} parent=1 // pred_region
      %s25 = ssub.s32 3584, 3584
      %26 = vsyncadd [#allocation3], %s25
      %s27 = sshll.u32 [#allocation6], 4
      %s28 = int_to_ptr.vmem [resolvable:$true] %s27
      %33 = dma.hbm_to_vmem [thread:$0]  %s1, 3584, %s28, [#allocation3], 512, 512, 32
    $region9: #{tpu_custom_call.1} parent=1 // pred_fallthru
      _
    // Predicated region
    $region10: #{tpu_custom_call.1} parent=1 // pred_check
      _
    $region11: #{tpu_custom_call.1} parent=1 // pred_check_branch
      %35 = sbr.rel (0) target = $region13
    $region12: #{tpu_custom_call.1} parent=1 // pred_region
      %s37 = ssub.s32 8192, 8192
      %38 = vsyncadd [#allocation8], %s37
      %s39 = sshll.u32 [#allocation7], 4
      %s40 = int_to_ptr.vmem [resolvable:$true] %s39
      %45 = dma.hbm_to_vmem [thread:$0]  %s2, 8192, %s40, [#allocation8], 512, 512, 32
    $region13: #{tpu_custom_call.1} parent=1 // pred_fallthru
      _
    // Predicated region
    $region14: #{tpu_custom_call.1} parent=1 // pred_check
      _
    $region15: #{tpu_custom_call.1} parent=1 // pred_check_branch
      %47 = sbr.rel (0) target = $region17
    $region16: #{tpu_custom_call.1} parent=1 // pred_region
      %s49 = ssub.s32 2048, 2048
      %50 = vsyncadd [#allocation8], %s49
      %s51 = sshll.u32 [#allocation9], 4
      %s52 = int_to_ptr.vmem [resolvable:$true] %s51
      %57 = dma.hbm_to_vmem [thread:$0]  %s3, 2048, %s52, [#allocation8], 128, 128, 8
    $region17: #{tpu_custom_call.1} parent=1 // pred_fallthru
      _
    // Predicated region
    $region18: #{tpu_custom_call.1} parent=1 // pred_check
      _
    $region19: #{tpu_custom_call.1} parent=1 // pred_check_branch
      %59 = sbr.rel (0) target = $region21
    $region20: #{tpu_custom_call.1} parent=1 // pred_region
      _
    $region21: #{tpu_custom_call.1} parent=1 // pred_fallthru
      _
    // Predicated region
    $region22: #{tpu_custom_call.1} parent=1 // pred_check
      _
    $region23: #{tpu_custom_call.1} parent=1 // pred_check_branch
      %61 = sbr.rel (0) target = $region25
    $region24: #{tpu_custom_call.1} parent=1 // pred_region
      %62 = dma.done [#allocation5], 16
    $region25: #{tpu_custom_call.1} parent=1 // pred_fallthru
      _
    // Predicated region
    $region26: #{tpu_custom_call.1} parent=1 // pred_check
      _
    $region27: #{tpu_custom_call.1} parent=1 // pred_check_branch
      %64 = sbr.rel (0) target = $region29
    $region28: #{tpu_custom_call.1} parent=1 // pred_region
      %65 = dma.done [#allocation3], 3584
    $region29: #{tpu_custom_call.1} parent=1 // pred_fallthru
      _
    // Predicated region
    $region30: #{tpu_custom_call.1} parent=1 // pred_check
      _
    $region31: #{tpu_custom_call.1} parent=1 // pred_check_branch
      %67 = sbr.rel (0) target = $region33
    $region32: #{tpu_custom_call.1} parent=1 // pred_region
      %68 = dma.done [#allocation8], 8192
    $region33: #{tpu_custom_call.1} parent=1 // pred_fallthru
      _
    // Predicated region
    $region34: #{tpu_custom_call.1} parent=1 // pred_check
      _
    $region35: #{tpu_custom_call.1} parent=1 // pred_check_branch
      %70 = sbr.rel (0) target = $region37
    $region36: #{tpu_custom_call.1} parent=1 // pred_region
      %71 = dma.done [#allocation8], 2048
    $region37: #{tpu_custom_call.1} parent=1 // pred_fallthru
      _
    %72 = sfence
    %v73 = vld [vmem:[#allocation7] sm:$0xff]
    %v74 = vld [vmem:[#allocation7 + $0x8] sm:$0xff]
    %v75 = vld [vmem:[#allocation7 + $0x10] sm:$0xff]
    %v76 = vld [vmem:[#allocation7 + $0x18] sm:$0xff]
    %v77 = vld [vmem:[#allocation7 + $0x20] sm:$0xff]
    %v78 = vld [vmem:[#allocation7 + $0x28] sm:$0xff]
    %v79 = vld [vmem:[#allocation7 + $0x30] sm:$0xff]
    %v80 = vld [vmem:[#allocation7 + $0x38] sm:$0xff]
    %v81 = vld [vmem:[#allocation7 + $0x40] sm:$0xff]
    %v82 = vld [vmem:[#allocation7 + $0x48] sm:$0xff]
    %v83 = vld [vmem:[#allocation7 + $0x50] sm:$0xff]
    %v84 = vld [vmem:[#allocation7 + $0x58] sm:$0xff]
    %v85 = vld [vmem:[#allocation7 + $0x60] sm:$0xff]
    %v86 = vld [vmem:[#allocation7 + $0x68] sm:$0xff]
    %v87 = vld [vmem:[#allocation7 + $0x70] sm:$0xff]
    %v88 = vld [vmem:[#allocation7 + $0x78] sm:$0xff]
    %v89 = vld [vmem:[#allocation7 + $0x80] sm:$0xff]
    %v90 = vld [vmem:[#allocation7 + $0x88] sm:$0xff]
    %v91 = vld [vmem:[#allocation7 + $0x90] sm:$0xff]
    %v92 = vld [vmem:[#allocation7 + $0x98] sm:$0xff]
    %v93 = vld [vmem:[#allocation7 + $0xa0] sm:$0xff]
    %v94 = vld [vmem:[#allocation7 + $0xa8] sm:$0xff]
    %v95 = vld [vmem:[#allocation7 + $0xb0] sm:$0xff]
    %v96 = vld [vmem:[#allocation7 + $0xb8] sm:$0xff]
    %v97 = vld [vmem:[#allocation7 + $0xc0] sm:$0xff]
    %v98 = vld [vmem:[#allocation7 + $0xc8] sm:$0xff]
    %v99 = vld [vmem:[#allocation7 + $0xd0] sm:$0xff]
    %v100 = vld [vmem:[#allocation7 + $0xd8] sm:$0xff]
    %v101 = vld [vmem:[#allocation7 + $0xe0] sm:$0xff]
    %v102 = vld [vmem:[#allocation7 + $0xe8] sm:$0xff]
    %v103 = vld [vmem:[#allocation7 + $0xf0] sm:$0xff]
    %v104 = vld [vmem:[#allocation7 + $0xf8] sm:$0xff]
    %v105 = vld [vmem:[#allocation7 + $0x100] sm:$0xff]
    %v106 = vld [vmem:[#allocation7 + $0x108] sm:$0xff]
    %v107 = vld [vmem:[#allocation7 + $0x110] sm:$0xff]
    %v108 = vld [vmem:[#allocation7 + $0x118] sm:$0xff]
    %v109 = vld [vmem:[#allocation7 + $0x120] sm:$0xff]
    %v110 = vld [vmem:[#allocation7 + $0x128] sm:$0xff]
    %v111 = vld [vmem:[#allocation7 + $0x130] sm:$0xff]
    %v112 = vld [vmem:[#allocation7 + $0x138] sm:$0xff]
    %v113 = vld [vmem:[#allocation7 + $0x140] sm:$0xff]
    %v114 = vld [vmem:[#allocation7 + $0x148] sm:$0xff]
    %v115 = vld [vmem:[#allocation7 + $0x150] sm:$0xff]
    %v116 = vld [vmem:[#allocation7 + $0x158] sm:$0xff]
    %v117 = vld [vmem:[#allocation7 + $0x160] sm:$0xff]
    %v118 = vld [vmem:[#allocation7 + $0x168] sm:$0xff]
    %v119 = vld [vmem:[#allocation7 + $0x170] sm:$0xff]
    %v120 = vld [vmem:[#allocation7 + $0x178] sm:$0xff]
    %v121 = vld [vmem:[#allocation7 + $0x180] sm:$0xff]
    %v122 = vld [vmem:[#allocation7 + $0x188] sm:$0xff]
    %v123 = vld [vmem:[#allocation7 + $0x190] sm:$0xff]
    %v124 = vld [vmem:[#allocation7 + $0x198] sm:$0xff]
    %v125 = vld [vmem:[#allocation7 + $0x1a0] sm:$0xff]
    %v126 = vld [vmem:[#allocation7 + $0x1a8] sm:$0xff]
    %v127 = vld [vmem:[#allocation7 + $0x1b0] sm:$0xff]
    %v128 = vld [vmem:[#allocation7 + $0x1b8] sm:$0xff]
    %v129 = vld [vmem:[#allocation7 + $0x1c0] sm:$0xff]
    %v130 = vld [vmem:[#allocation7 + $0x1c8] sm:$0xff]
    %v131 = vld [vmem:[#allocation7 + $0x1d0] sm:$0xff]
    %v132 = vld [vmem:[#allocation7 + $0x1d8] sm:$0xff]
    %v133 = vld [vmem:[#allocation7 + $0x1e0] sm:$0xff]
    %v134 = vld [vmem:[#allocation7 + $0x1e8] sm:$0xff]
    %v135 = vld [vmem:[#allocation7 + $0x1f0] sm:$0xff]
    %v136 = vld [vmem:[#allocation7 + $0x1f8] sm:$0xff]
    %s137 = sld [smem:[#allocation2]]
    %s138 = sshra.s32 %s137, 3
    %s139 = sand.u32 %s137, 7
    %s140 = sshra.s32 %s137, 3
    %s141 = sand.u32 %s137, 7
    %s142 = smul.u32 %s138, 4
    %s143 = smul.u32 %s142, 8
    %s144 = sadd.s32 %s143, %s141
    %s145 = scalar_lea.vmem [#allocation6], %s144
    %v146 = vld [vmem:[%s145] ss:$8 sm:$0xf]
    %147 = vmatprep.subr.mxu0 %v74
    %148 = vmatpush1.msra.mxu0 %v73
    %149 = vmatprep.subr.mxu0 %v78
    %150 = vmatpush1.msra.mxu0 %v77
    %151 = vmatprep.subr.mxu0 %v82
    %152 = vmatpush1.msra.mxu0 %v81
    %153 = vmatprep.subr.mxu0 %v86
    %154 = vmatpush1.msra.mxu0 %v85
    %155 = vmatprep.subr.mxu0 %v90
    %156 = vmatpush1.msra.mxu0 %v89
    %157 = vmatprep.subr.mxu0 %v94
    %158 = vmatpush1.msra.mxu0 %v93
    %159 = vmatprep.subr.mxu0 %v98
    %160 = vmatpush1.msra.mxu0 %v97
    %161 = vmatprep.subr.mxu0 %v102
    %162 = vmatpush1.msra.mxu0 %v101
    %163 = vmatprep.subr.mxu0 %v106
    %164 = vmatpush1.msra.mxu0 %v105
    %165 = vmatprep.subr.mxu0 %v110
    %166 = vmatpush1.msra.mxu0 %v109
    %167 = vmatprep.subr.mxu0 %v114
    %168 = vmatpush1.msra.mxu0 %v113
    %169 = vmatprep.subr.mxu0 %v118
    %170 = vmatpush1.msra.mxu0 %v117
    %171 = vmatprep.subr.mxu0 %v122
    %172 = vmatpush1.msra.mxu0 %v121
    %173 = vmatprep.subr.mxu0 %v126
    %174 = vmatpush1.msra.mxu0 %v125
    %175 = vmatprep.subr.mxu0 %v130
    %176 = vmatpush1.msra.mxu0 %v129
    %177 = vmatprep.subr.mxu0 %v134
    %178 = vmatpush1.msra.mxu0 %v133
    %179 = vmatprep.subr.mxu0 0.0
    %180 = vmatpush1.msra.mxu0 0.0
    %181 = vmatprep.subr.mxu0 0.0
    %182 = vmatpush1.msra.mxu0 0.0
    %183 = vmatprep.subr.mxu0 0.0
    %184 = vmatpush1.msra.mxu0 0.0
    %185 = vmatprep.subr.mxu0 0.0
    %186 = vmatpush1.msra.mxu0 0.0
    %187 = vmatprep.subr.mxu0 0.0
    %188 = vmatpush1.msra.mxu0 0.0
    %189 = vmatprep.subr.mxu0 0.0
    %190 = vmatpush1.msra.mxu0 0.0
    %191 = vmatprep.subr.mxu0 0.0
    %192 = vmatpush1.msra.mxu0 0.0
    %193 = vmatprep.subr.mxu0 0.0
    %194 = vmatpush1.msra.mxu0 0.0
    %195 = vmatprep.subr.mxu0 0.0
    %196 = vmatpush1.msra.mxu0 0.0
    %197 = vmatprep.subr.mxu0 0.0
    %198 = vmatpush1.msra.mxu0 0.0
    %199 = vmatprep.subr.mxu0 0.0
    %200 = vmatpush1.msra.mxu0 0.0
    %201 = vmatprep.subr.mxu0 0.0
    %202 = vmatpush1.msra.mxu0 0.0
    %203 = vmatprep.subr.mxu0 0.0
    %204 = vmatpush1.msra.mxu0 0.0
    %205 = vmatprep.subr.mxu0 0.0
    %206 = vmatpush1.msra.mxu0 0.0
    %207 = vmatprep.subr.mxu0 0.0
    %208 = vmatpush1.msra.mxu0 0.0
    %209 = vmatprep.subr.mxu0 0.0
    %210 = vmatpush1.msra.mxu0 0.0
    %211 = vmatprep.mubr.f32.mxu0 0.0
    %212 = vmatmul.mubr.f32.gmra.mrb[0].mxu0 0.0
    %v213 = vpop.f32.mrb[0].mxu0
    %v214 = vadd.f32 0.0, %v213
    %v215 = vpop.f32.mrb[0].mxu0
    %v216 = vadd.f32 0.0, %v215
    %217 = vdwg.mxu0
    %218 = vmatprep.subr.mxu0 %v76
    %219 = vmatpush1.msra.mxu0 %v75
    %220 = vmatprep.subr.mxu0 %v80
    %221 = vmatpush1.msra.mxu0 %v79
    %222 = vmatprep.subr.mxu0 %v84
    %223 = vmatpush1.msra.mxu0 %v83
    %224 = vmatprep.subr.mxu0 %v88
    %225 = vmatpush1.msra.mxu0 %v87
    %226 = vmatprep.subr.mxu0 %v92
    %227 = vmatpush1.msra.mxu0 %v91
    %228 = vmatprep.subr.mxu0 %v96
    %229 = vmatpush1.msra.mxu0 %v95
    %230 = vmatprep.subr.mxu0 %v100
    %231 = vmatpush1.msra.mxu0 %v99
    %232 = vmatprep.subr.mxu0 %v104
    %233 = vmatpush1.msra.mxu0 %v103
    %234 = vmatprep.subr.mxu0 %v108
    %235 = vmatpush1.msra.mxu0 %v107
    %236 = vmatprep.subr.mxu0 %v112
    %237 = vmatpush1.msra.mxu0 %v111
    %238 = vmatprep.subr.mxu0 %v116
    %239 = vmatpush1.msra.mxu0 %v115
    %240 = vmatprep.subr.mxu0 %v120
    %241 = vmatpush1.msra.mxu0 %v119
    %242 = vmatprep.subr.mxu0 %v124
    %243 = vmatpush1.msra.mxu0 %v123
    %244 = vmatprep.subr.mxu0 %v128
    %245 = vmatpush1.msra.mxu0 %v127
    %246 = vmatprep.subr.mxu0 %v132
    %247 = vmatpush1.msra.mxu0 %v131
    %248 = vmatprep.subr.mxu0 %v136
    %249 = vmatpush1.msra.mxu0 %v135
    %250 = vmatprep.subr.mxu0 0.0
    %251 = vmatpush1.msra.mxu0 0.0
    %252 = vmatprep.subr.mxu0 0.0
    %253 = vmatpush1.msra.mxu0 0.0
    %254 = vmatprep.subr.mxu0 0.0
    %255 = vmatpush1.msra.mxu0 0.0
    %256 = vmatprep.subr.mxu0 0.0
    %257 = vmatpush1.msra.mxu0 0.0
    %258 = vmatprep.subr.mxu0 0.0
    %259 = vmatpush1.msra.mxu0 0.0
    %260 = vmatprep.subr.mxu0 0.0
    %261 = vmatpush1.msra.mxu0 0.0
    %262 = vmatprep.subr.mxu0 0.0
    %263 = vmatpush1.msra.mxu0 0.0
    %264 = vmatprep.subr.mxu0 0.0
    %265 = vmatpush1.msra.mxu0 0.0
    %266 = vmatprep.subr.mxu0 0.0
    %267 = vmatpush1.msra.mxu0 0.0
    %268 = vmatprep.subr.mxu0 0.0
    %269 = vmatpush1.msra.mxu0 0.0
    %270 = vmatprep.subr.mxu0 0.0
    %271 = vmatpush1.msra.mxu0 0.0
    %272 = vmatprep.subr.mxu0 0.0
    %273 = vmatpush1.msra.mxu0 0.0
    %274 = vmatprep.subr.mxu0 0.0
    %275 = vmatpush1.msra.mxu0 0.0
    %276 = vmatprep.subr.mxu0 0.0
    %277 = vmatpush1.msra.mxu0 0.0
    %278 = vmatprep.subr.mxu0 0.0
    %279 = vmatpush1.msra.mxu0 0.0
    %280 = vmatprep.subr.mxu0 0.0
    %281 = vmatpush1.msra.mxu0 0.0
    %282 = vmatprep.mubr.f32.mxu0 0.0
    %283 = vmatmul.mubr.f32.gmra.mrb[0].mxu0 0.0
    %v284 = vpop.f32.mrb[0].mxu0
    %v285 = vadd.f32 0.0, %v284
    %v286 = vpop.f32.mrb[0].mxu0
    %v287 = vadd.f32 0.0, %v286
    %288 = vdwg.mxu0
    %v293 = vcombine.low %v214, %v216
    %v294 = vcombine.low %v285, %v287
    %v296 = vunpack.c.l.s4 1966171168
    %v297 = vunpack.c.0.s8 %v296
    %v298 = vlaneseq
    %v299 = vshrl.u32 %v298, 7
    %v300 = vsub.s32 %v297, %v299
    %v301 = vrot.slane %v293, %v300
    %v303 = vunpack.c.l.s4 1966171168
    %v304 = vunpack.c.0.s8 %v303
    %v305 = vlaneseq
    %v306 = vshrl.u32 %v305, 7
    %v307 = vsub.s32 %v304, %v306
    %v308 = vrot.slane %v294, %v307
    %v309 = vcombine.low %v301, %v308
    %v311 = vunpack.c.l.s4 1966171168
    %v312 = vunpack.c.0.s8 %v311
    %v313 = vlaneseq
    %v314 = vshrl.u32 %v313, 7
    %v315 = vsub.s32 %v312, %v314
    %v316 = vrot.slane %v309, %v315
    %v318 = vadd.f32 %v146, %v316
    %v319 = vxor.u32 %v318, 2147483648
    %v320 = vmul.f32 %v319, 1.442695
    %v321 = vpow.pop %v320
    %v322 = vadd.f32 %v321, 1.0
    %v323 = vrcp.pop %v322
    %v324 = vmul.f32 1.0, %v323
    %v326 = vrot.slane %v318, 1
    %v328 = vxor.u32 %v326, 2147483648
    %v329 = vmul.f32 %v328, 1.442695
    %v330 = vpow.pop %v329
    %v331 = vadd.f32 %v330, 1.0
    %v332 = vrcp.pop %v331
    %v333 = vmul.f32 1.0, %v332
    %v334 = vrot.slane %v318, 2
    %v336 = vtanh.pop %v334
    %v337 = vrot.slane %v318, 3
    %v339 = vxor.u32 %v337, 2147483648
    %v340 = vmul.f32 %v339, 1.442695
    %v341 = vpow.pop %v340
    %v342 = vadd.f32 %v341, 1.0
    %v343 = vrcp.pop %v342
    %v344 = vmul.f32 1.0, %v343
    %v345 = vmul.f32 %v333, 0.0
    %v346 = vmul.f32 %v324, %v336
    %v347 = vadd.f32 %v345, %v346
    %v348 = vtanh.pop %v347
    %v349 = vmul.f32 %v344, %v348
    %s350 = sld [smem:[#allocation2 + $0x1]]
    %s351 = sshra.s32 %s350, 3
    %s352 = sand.u32 %s350, 7
    %s353 = sshra.s32 %s350, 3
    %s354 = sand.u32 %s350, 7
    %s355 = smul.u32 %s351, 4
    %s356 = smul.u32 %s355, 8
    %s357 = sadd.s32 %s356, %s354
    %s358 = scalar_lea.vmem [#allocation6], %s357
    %v359 = vld [vmem:[%s358] ss:$8 sm:$0xf]
    %360 = vmatprep.subr.mxu0 %v74
    %361 = vmatpush1.msra.mxu0 %v73
    %362 = vmatprep.subr.mxu0 %v78
    %363 = vmatpush1.msra.mxu0 %v77
    %364 = vmatprep.subr.mxu0 %v82
    %365 = vmatpush1.msra.mxu0 %v81
    %366 = vmatprep.subr.mxu0 %v86
    %367 = vmatpush1.msra.mxu0 %v85
    %368 = vmatprep.subr.mxu0 %v90
    %369 = vmatpush1.msra.mxu0 %v89
    %370 = vmatprep.subr.mxu0 %v94
    %371 = vmatpush1.msra.mxu0 %v93
    %372 = vmatprep.subr.mxu0 %v98
    %373 = vmatpush1.msra.mxu0 %v97
    %374 = vmatprep.subr.mxu0 %v102
    %375 = vmatpush1.msra.mxu0 %v101
    %376 = vmatprep.subr.mxu0 %v106
    %377 = vmatpush1.msra.mxu0 %v105
    %378 = vmatprep.subr.mxu0 %v110
    %379 = vmatpush1.msra.mxu0 %v109
    %380 = vmatprep.subr.mxu0 %v114
    %381 = vmatpush1.msra.mxu0 %v113
    %382 = vmatprep.subr.mxu0 %v118
    %383 = vmatpush1.msra.mxu0 %v117
    %384 = vmatprep.subr.mxu0 %v122
    %385 = vmatpush1.msra.mxu0 %v121
    %386 = vmatprep.subr.mxu0 %v126
    %387 = vmatpush1.msra.mxu0 %v125
    %388 = vmatprep.subr.mxu0 %v130
    %389 = vmatpush1.msra.mxu0 %v129
    %390 = vmatprep.subr.mxu0 %v134
    %391 = vmatpush1.msra.mxu0 %v133
    %392 = vmatprep.subr.mxu0 0.0
    %393 = vmatpush1.msra.mxu0 0.0
    %394 = vmatprep.subr.mxu0 0.0
    %395 = vmatpush1.msra.mxu0 0.0
    %396 = vmatprep.subr.mxu0 0.0
    %397 = vmatpush1.msra.mxu0 0.0
    %398 = vmatprep.subr.mxu0 0.0
    %399 = vmatpush1.msra.mxu0 0.0
    %400 = vmatprep.subr.mxu0 0.0
    %401 = vmatpush1.msra.mxu0 0.0
    %402 = vmatprep.subr.mxu0 0.0
    %403 = vmatpush1.msra.mxu0 0.0
    %404 = vmatprep.subr.mxu0 0.0
    %405 = vmatpush1.msra.mxu0 0.0
    %406 = vmatprep.subr.mxu0 0.0
    %407 = vmatpush1.msra.mxu0 0.0
    %408 = vmatprep.subr.mxu0 0.0
    %409 = vmatpush1.msra.mxu0 0.0
    %410 = vmatprep.subr.mxu0 0.0
    %411 = vmatpush1.msra.mxu0 0.0
    %412 = vmatprep.subr.mxu0 0.0
    %413 = vmatpush1.msra.mxu0 0.0
    %414 = vmatprep.subr.mxu0 0.0
    %415 = vmatpush1.msra.mxu0 0.0
    %416 = vmatprep.subr.mxu0 0.0
    %417 = vmatpush1.msra.mxu0 0.0
    %418 = vmatprep.subr.mxu0 0.0
    %419 = vmatpush1.msra.mxu0 0.0
    %420 = vmatprep.subr.mxu0 0.0
    %421 = vmatpush1.msra.mxu0 0.0
    %422 = vmatprep.subr.mxu0 0.0
    %423 = vmatpush1.msra.mxu0 0.0
    %424 = vmatprep.mubr.f32.mxu0 0.0
    %425 = vmatmul.mubr.f32.gmra.mrb[0].mxu0 %v349
    %v426 = vpop.f32.mrb[0].mxu0
    %v427 = vadd.f32 0.0, %v426
    %v428 = vpop.f32.mrb[0].mxu0
    %v429 = vadd.f32 0.0, %v428
    %430 = vdwg.mxu0
    %431 = vmatprep.subr.mxu0 %v76
    %432 = vmatpush1.msra.mxu0 %v75
    %433 = vmatprep.subr.mxu0 %v80
    %434 = vmatpush1.msra.mxu0 %v79
    %435 = vmatprep.subr.mxu0 %v84
    %436 = vmatpush1.msra.mxu0 %v83
    %437 = vmatprep.subr.mxu0 %v88
    %438 = vmatpush1.msra.mxu0 %v87
    %439 = vmatprep.subr.mxu0 %v92
    %440 = vmatpush1.msra.mxu0 %v91
    %441 = vmatprep.subr.mxu0 %v96
    %442 = vmatpush1.msra.mxu0 %v95
    %443 = vmatprep.subr.mxu0 %v100
    %444 = vmatpush1.msra.mxu0 %v99
    %445 = vmatprep.subr.mxu0 %v104
    %446 = vmatpush1.msra.mxu0 %v103
    %447 = vmatprep.subr.mxu0 %v108
    %448 = vmatpush1.msra.mxu0 %v107
    %449 = vmatprep.subr.mxu0 %v112
    %450 = vmatpush1.msra.mxu0 %v111
    %451 = vmatprep.subr.mxu0 %v116
    %452 = vmatpush1.msra.mxu0 %v115
    %453 = vmatprep.subr.mxu0 %v120
    %454 = vmatpush1.msra.mxu0 %v119
    %455 = vmatprep.subr.mxu0 %v124
    %456 = vmatpush1.msra.mxu0 %v123
    %457 = vmatprep.subr.mxu0 %v128
    %458 = vmatpush1.msra.mxu0 %v127
    %459 = vmatprep.subr.mxu0 %v132
    %460 = vmatpush1.msra.mxu0 %v131
    %461 = vmatprep.subr.mxu0 %v136
    %462 = vmatpush1.msra.mxu0 %v135
    %463 = vmatprep.subr.mxu0 0.0
    %464 = vmatpush1.msra.mxu0 0.0
    %465 = vmatprep.subr.mxu0 0.0
    %466 = vmatpush1.msra.mxu0 0.0
    %467 = vmatprep.subr.mxu0 0.0
    %468 = vmatpush1.msra.mxu0 0.0
    %469 = vmatprep.subr.mxu0 0.0
    %470 = vmatpush1.msra.mxu0 0.0
    %471 = vmatprep.subr.mxu0 0.0
    %472 = vmatpush1.msra.mxu0 0.0
    %473 = vmatprep.subr.mxu0 0.0
    %474 = vmatpush1.msra.mxu0 0.0
    %475 = vmatprep.subr.mxu0 0.0
    %476 = vmatpush1.msra.mxu0 0.0
    %477 = vmatprep.subr.mxu0 0.0
    %478 = vmatpush1.msra.mxu0 0.0
    %479 = vmatprep.subr.mxu0 0.0
    %480 = vmatpush1.msra.mxu0 0.0
    %481 = vmatprep.subr.mxu0 0.0
    %482 = vmatpush1.msra.mxu0 0.0
    %483 = vmatprep.subr.mxu0 0.0
    %484 = vmatpush1.msra.mxu0 0.0
    %485 = vmatprep.subr.mxu0 0.0
    %486 = vmatpush1.msra.mxu0 0.0
    %487 = vmatprep.subr.mxu0 0.0
    %488 = vmatpush1.msra.mxu0 0.0
    %489 = vmatprep.subr.mxu0 0.0
    %490 = vmatpush1.msra.mxu0 0.0
    %491 = vmatprep.subr.mxu0 0.0
    %492 = vmatpush1.msra.mxu0 0.0
    %493 = vmatprep.subr.mxu0 0.0
    %494 = vmatpush1.msra.mxu0 0.0
    %495 = vmatprep.mubr.f32.mxu0 0.0
    %496 = vmatmul.mubr.f32.gmra.mrb[0].mxu0 %v349
    %v497 = vpop.f32.mrb[0].mxu0
    %v498 = vadd.f32 0.0, %v497
    %v499 = vpop.f32.mrb[0].mxu0
    %v500 = vadd.f32 0.0, %v499
    %501 = vdwg.mxu0
    %v506 = vcombine.low %v427, %v429
    %v507 = vcombine.low %v498, %v500
    %v509 = vunpack.c.l.s4 1966171168
    %v510 = vunpack.c.0.s8 %v509
    %v511 = vlaneseq
    %v512 = vshrl.u32 %v511, 7
    %v513 = vsub.s32 %v510, %v512
    %v514 = vrot.slane %v506, %v513
    %v516 = vunpack.c.l.s4 1966171168
    %v517 = vunpack.c.0.s8 %v516
    %v518 = vlaneseq
    %v519 = vshrl.u32 %v518, 7
    %v520 = vsub.s32 %v517, %v519
    %v521 = vrot.slane %v507, %v520
    %v522 = vcombine.low %v514, %v521
    %v524 = vunpack.c.l.s4 1966171168
    %v525 = vunpack.c.0.s8 %v524
    %v526 = vlaneseq
    %v527 = vshrl.u32 %v526, 7
    %v528 = vsub.s32 %v525, %v527
    %v529 = vrot.slane %v522, %v528
    %v531 = vadd.f32 %v359, %v529
    %v532 = vxor.u32 %v531, 2147483648
    %v533 = vmul.f32 %v532, 1.442695
    %v534 = vpow.pop %v533
    %v535 = vadd.f32 %v534, 1.0
    %v536 = vrcp.pop %v535
    %v537 = vmul.f32 1.0, %v536
    %v539 = vrot.slane %v531, 1
    %v541 = vxor.u32 %v539, 2147483648
    %v542 = vmul.f32 %v541, 1.442695
    %v543 = vpow.pop %v542
    %v544 = vadd.f32 %v543, 1.0
    %v545 = vrcp.pop %v544
    %v546 = vmul.f32 1.0, %v545
    %v547 = vrot.slane %v531, 2
    %v549 = vtanh.pop %v547
    %v550 = vrot.slane %v531, 3
    %v552 = vxor.u32 %v550, 2147483648
    %v553 = vmul.f32 %v552, 1.442695
    %v554 = vpow.pop %v553
    %v555 = vadd.f32 %v554, 1.0
    %v556 = vrcp.pop %v555
    %v557 = vmul.f32 1.0, %v556
    %v558 = vmul.f32 %v546, %v347
    %v559 = vmul.f32 %v537, %v549
    %v560 = vadd.f32 %v558, %v559
    %v561 = vtanh.pop %v560
    %v562 = vmul.f32 %v557, %v561
    %s563 = sld [smem:[#allocation2 + $0x2]]
    %s564 = sshra.s32 %s563, 3
    %s565 = sand.u32 %s563, 7
    %s566 = sshra.s32 %s563, 3
    %s567 = sand.u32 %s563, 7
    %s568 = smul.u32 %s564, 4
    %s569 = smul.u32 %s568, 8
    %s570 = sadd.s32 %s569, %s567
    %s571 = scalar_lea.vmem [#allocation6], %s570
    %v572 = vld [vmem:[%s571] ss:$8 sm:$0xf]
    %573 = vmatprep.subr.mxu0 %v74
    %574 = vmatpush1.msra.mxu0 %v73
    %575 = vmatprep.subr.mxu0 %v78
    %576 = vmatpush1.msra.mxu0 %v77
    %577 = vmatprep.subr.mxu0 %v82
    %578 = vmatpush1.msra.mxu0 %v81
    %579 = vmatprep.subr.mxu0 %v86
    %580 = vmatpush1.msra.mxu0 %v85
    %581 = vmatprep.subr.mxu0 %v90
    %582 = vmatpush1.msra.mxu0 %v89
    %583 = vmatprep.subr.mxu0 %v94
    %584 = vmatpush1.msra.mxu0 %v93
    %585 = vmatprep.subr.mxu0 %v98
    %586 = vmatpush1.msra.mxu0 %v97
    %587 = vmatprep.subr.mxu0 %v102
    %588 = vmatpush1.msra.mxu0 %v101
    %589 = vmatprep.subr.mxu0 %v106
    %590 = vmatpush1.msra.mxu0 %v105
    %591 = vmatprep.subr.mxu0 %v110
    %592 = vmatpush1.msra.mxu0 %v109
    %593 = vmatprep.subr.mxu0 %v114
    %594 = vmatpush1.msra.mxu0 %v113
    %595 = vmatprep.subr.mxu0 %v118
    %596 = vmatpush1.msra.mxu0 %v117
    %597 = vmatprep.subr.mxu0 %v122
    %598 = vmatpush1.msra.mxu0 %v121
    %599 = vmatprep.subr.mxu0 %v126
    %600 = vmatpush1.msra.mxu0 %v125
    %601 = vmatprep.subr.mxu0 %v130
    %602 = vmatpush1.msra.mxu0 %v129
    %603 = vmatprep.subr.mxu0 %v134
    %604 = vmatpush1.msra.mxu0 %v133
    %605 = vmatprep.subr.mxu0 0.0
    %606 = vmatpush1.msra.mxu0 0.0
    %607 = vmatprep.subr.mxu0 0.0
    %608 = vmatpush1.msra.mxu0 0.0
    %609 = vmatprep.subr.mxu0 0.0
    %610 = vmatpush1.msra.mxu0 0.0
    %611 = vmatprep.subr.mxu0 0.0
    %612 = vmatpush1.msra.mxu0 0.0
    %613 = vmatprep.subr.mxu0 0.0
    %614 = vmatpush1.msra.mxu0 0.0
    %615 = vmatprep.subr.mxu0 0.0
    %616 = vmatpush1.msra.mxu0 0.0
    %617 = vmatprep.subr.mxu0 0.0
    %618 = vmatpush1.msra.mxu0 0.0
    %619 = vmatprep.subr.mxu0 0.0
    %620 = vmatpush1.msra.mxu0 0.0
    %621 = vmatprep.subr.mxu0 0.0
    %622 = vmatpush1.msra.mxu0 0.0
    %623 = vmatprep.subr.mxu0 0.0
    %624 = vmatpush1.msra.mxu0 0.0
    %625 = vmatprep.subr.mxu0 0.0
    %626 = vmatpush1.msra.mxu0 0.0
    %627 = vmatprep.subr.mxu0 0.0
    %628 = vmatpush1.msra.mxu0 0.0
    %629 = vmatprep.subr.mxu0 0.0
    %630 = vmatpush1.msra.mxu0 0.0
    %631 = vmatprep.subr.mxu0 0.0
    %632 = vmatpush1.msra.mxu0 0.0
    %633 = vmatprep.subr.mxu0 0.0
    %634 = vmatpush1.msra.mxu0 0.0
    %635 = vmatprep.subr.mxu0 0.0
    %636 = vmatpush1.msra.mxu0 0.0
    %637 = vmatprep.mubr.f32.mxu0 0.0
    %638 = vmatmul.mubr.f32.gmra.mrb[0].mxu0 %v562
    %v639 = vpop.f32.mrb[0].mxu0
    %v640 = vadd.f32 0.0, %v639
    %v641 = vpop.f32.mrb[0].mxu0
    %v642 = vadd.f32 0.0, %v641
    %643 = vdwg.mxu0
    %644 = vmatprep.subr.mxu0 %v76
    %645 = vmatpush1.msra.mxu0 %v75
    %646 = vmatprep.subr.mxu0 %v80
    %647 = vmatpush1.msra.mxu0 %v79
    %648 = vmatprep.subr.mxu0 %v84
    %649 = vmatpush1.msra.mxu0 %v83
    %650 = vmatprep.subr.mxu0 %v88
    %651 = vmatpush1.msra.mxu0 %v87
    %652 = vmatprep.subr.mxu0 %v92
    %653 = vmatpush1.msra.mxu0 %v91
    %654 = vmatprep.subr.mxu0 %v96
    %655 = vmatpush1.msra.mxu0 %v95
    %656 = vmatprep.subr.mxu0 %v100
    %657 = vmatpush1.msra.mxu0 %v99
    %658 = vmatprep.subr.mxu0 %v104
    %659 = vmatpush1.msra.mxu0 %v103
    %660 = vmatprep.subr.mxu0 %v108
    %661 = vmatpush1.msra.mxu0 %v107
    %662 = vmatprep.subr.mxu0 %v112
    %663 = vmatpush1.msra.mxu0 %v111
    %664 = vmatprep.subr.mxu0 %v116
    %665 = vmatpush1.msra.mxu0 %v115
    %666 = vmatprep.subr.mxu0 %v120
    %667 = vmatpush1.msra.mxu0 %v119
    %668 = vmatprep.subr.mxu0 %v124
    %669 = vmatpush1.msra.mxu0 %v123
    %670 = vmatprep.subr.mxu0 %v128
    %671 = vmatpush1.msra.mxu0 %v127
    %672 = vmatprep.subr.mxu0 %v132
    %673 = vmatpush1.msra.mxu0 %v131
    %674 = vmatprep.subr.mxu0 %v136
    %675 = vmatpush1.msra.mxu0 %v135
    %676 = vmatprep.subr.mxu0 0.0
    %677 = vmatpush1.msra.mxu0 0.0
    %678 = vmatprep.subr.mxu0 0.0
    %679 = vmatpush1.msra.mxu0 0.0
    %680 = vmatprep.subr.mxu0 0.0
    %681 = vmatpush1.msra.mxu0 0.0
    %682 = vmatprep.subr.mxu0 0.0
    %683 = vmatpush1.msra.mxu0 0.0
    %684 = vmatprep.subr.mxu0 0.0
    %685 = vmatpush1.msra.mxu0 0.0
    %686 = vmatprep.subr.mxu0 0.0
    %687 = vmatpush1.msra.mxu0 0.0
    %688 = vmatprep.subr.mxu0 0.0
    %689 = vmatpush1.msra.mxu0 0.0
    %690 = vmatprep.subr.mxu0 0.0
    %691 = vmatpush1.msra.mxu0 0.0
    %692 = vmatprep.subr.mxu0 0.0
    %693 = vmatpush1.msra.mxu0 0.0
    %694 = vmatprep.subr.mxu0 0.0
    %695 = vmatpush1.msra.mxu0 0.0
    %696 = vmatprep.subr.mxu0 0.0
    %697 = vmatpush1.msra.mxu0 0.0
    %698 = vmatprep.subr.mxu0 0.0
    %699 = vmatpush1.msra.mxu0 0.0
    %700 = vmatprep.subr.mxu0 0.0
    %701 = vmatpush1.msra.mxu0 0.0
    %702 = vmatprep.subr.mxu0 0.0
    %703 = vmatpush1.msra.mxu0 0.0
    %704 = vmatprep.subr.mxu0 0.0
    %705 = vmatpush1.msra.mxu0 0.0
    %706 = vmatprep.subr.mxu0 0.0
    %707 = vmatpush1.msra.mxu0 0.0
    %708 = vmatprep.mubr.f32.mxu0 0.0
    %709 = vmatmul.mubr.f32.gmra.mrb[0].mxu0 %v562
    %v710 = vpop.f32.mrb[0].mxu0
    %v711 = vadd.f32 0.0, %v710
    %v712 = vpop.f32.mrb[0].mxu0
    %v713 = vadd.f32 0.0, %v712
    %714 = vdwg.mxu0
    %v719 = vcombine.low %v640, %v642
    %v720 = vcombine.low %v711, %v713
    %v722 = vunpack.c.l.s4 1966171168
    %v723 = vunpack.c.0.s8 %v722
    %v724 = vlaneseq
    %v725 = vshrl.u32 %v724, 7
    %v726 = vsub.s32 %v723, %v725
    %v727 = vrot.slane %v719, %v726
    %v729 = vunpack.c.l.s4 1966171168
    %v730 = vunpack.c.0.s8 %v729
    %v731 = vlaneseq
    %v732 = vshrl.u32 %v731, 7
    %v733 = vsub.s32 %v730, %v732
    %v734 = vrot.slane %v720, %v733
    %v735 = vcombine.low %v727, %v734
    %v737 = vunpack.c.l.s4 1966171168
    %v738 = vunpack.c.0.s8 %v737
    %v739 = vlaneseq
    %v740 = vshrl.u32 %v739, 7
    %v741 = vsub.s32 %v738, %v740
    %v742 = vrot.slane %v735, %v741
    %v744 = vadd.f32 %v572, %v742
    %v745 = vxor.u32 %v744, 2147483648
    %v746 = vmul.f32 %v745, 1.442695
    %v747 = vpow.pop %v746
    %v748 = vadd.f32 %v747, 1.0
    %v749 = vrcp.pop %v748
    %v750 = vmul.f32 1.0, %v749
    %v752 = vrot.slane %v744, 1
    %v754 = vxor.u32 %v752, 2147483648
    %v755 = vmul.f32 %v754, 1.442695
    %v756 = vpow.pop %v755
    %v757 = vadd.f32 %v756, 1.0
    %v758 = vrcp.pop %v757
    %v759 = vmul.f32 1.0, %v758
    %v760 = vrot.slane %v744, 2
    %v762 = vtanh.pop %v760
    %v763 = vrot.slane %v744, 3
    %v765 = vxor.u32 %v763, 2147483648
    %v766 = vmul.f32 %v765, 1.442695
    %v767 = vpow.pop %v766
    %v768 = vadd.f32 %v767, 1.0
    %v769 = vrcp.pop %v768
    %v770 = vmul.f32 1.0, %v769
    %v771 = vmul.f32 %v759, %v560
    %v772 = vmul.f32 %v750, %v762
    %v773 = vadd.f32 %v771, %v772
    %v774 = vtanh.pop %v773
    %v775 = vmul.f32 %v770, %v774
    %s776 = sld [smem:[#allocation2 + $0x3]]
    %s777 = sshra.s32 %s776, 3
    %s778 = sand.u32 %s776, 7
    %s779 = sshra.s32 %s776, 3
    %s780 = sand.u32 %s776, 7
    %s781 = smul.u32 %s777, 4
    %s782 = smul.u32 %s781, 8
    %s783 = sadd.s32 %s782, %s780
    %s784 = scalar_lea.vmem [#allocation6], %s783
    %v785 = vld [vmem:[%s784] ss:$8 sm:$0xf]
    %786 = vmatprep.subr.mxu0 %v74
    %787 = vmatpush1.msra.mxu0 %v73
    %788 = vmatprep.subr.mxu0 %v78
    %789 = vmatpush1.msra.mxu0 %v77
    %790 = vmatprep.subr.mxu0 %v82
    %791 = vmatpush1.msra.mxu0 %v81
    %792 = vmatprep.subr.mxu0 %v86
    %793 = vmatpush1.msra.mxu0 %v85
    %794 = vmatprep.subr.mxu0 %v90
    %795 = vmatpush1.msra.mxu0 %v89
    %796 = vmatprep.subr.mxu0 %v94
    %797 = vmatpush1.msra.mxu0 %v93
    %798 = vmatprep.subr.mxu0 %v98
    %799 = vmatpush1.msra.mxu0 %v97
    %800 = vmatprep.subr.mxu0 %v102
    %801 = vmatpush1.msra.mxu0 %v101
    %802 = vmatprep.subr.mxu0 %v106
    %803 = vmatpush1.msra.mxu0 %v105
    %804 = vmatprep.subr.mxu0 %v110
    %805 = vmatpush1.msra.mxu0 %v109
    %806 = vmatprep.subr.mxu0 %v114
    %807 = vmatpush1.msra.mxu0 %v113
    %808 = vmatprep.subr.mxu0 %v118
    %809 = vmatpush1.msra.mxu0 %v117
    %810 = vmatprep.subr.mxu0 %v122
    %811 = vmatpush1.msra.mxu0 %v121
    %812 = vmatprep.subr.mxu0 %v126
    %813 = vmatpush1.msra.mxu0 %v125
    %814 = vmatprep.subr.mxu0 %v130
    %815 = vmatpush1.msra.mxu0 %v129
    %816 = vmatprep.subr.mxu0 %v134
    %817 = vmatpush1.msra.mxu0 %v133
    %818 = vmatprep.subr.mxu0 0.0
    %819 = vmatpush1.msra.mxu0 0.0
    %820 = vmatprep.subr.mxu0 0.0
    %821 = vmatpush1.msra.mxu0 0.0
    %822 = vmatprep.subr.mxu0 0.0
    %823 = vmatpush1.msra.mxu0 0.0
    %824 = vmatprep.subr.mxu0 0.0
    %825 = vmatpush1.msra.mxu0 0.0
    %826 = vmatprep.subr.mxu0 0.0
    %827 = vmatpush1.msra.mxu0 0.0
    %828 = vmatprep.subr.mxu0 0.0
    %829 = vmatpush1.msra.mxu0 0.0
    %830 = vmatprep.subr.mxu0 0.0
    %831 = vmatpush1.msra.mxu0 0.0
    %832 = vmatprep.subr.mxu0 0.0
    %833 = vmatpush1.msra.mxu0 0.0
    %834 = vmatprep.subr.mxu0 0.0
    %835 = vmatpush1.msra.mxu0 0.0
    %836 = vmatprep.subr.mxu0 0.0
    %837 = vmatpush1.msra.mxu0 0.0
    %838 = vmatprep.subr.mxu0 0.0
    %839 = vmatpush1.msra.mxu0 0.0
    %840 = vmatprep.subr.mxu0 0.0
    %841 = vmatpush1.msra.mxu0 0.0
    %842 = vmatprep.subr.mxu0 0.0
    %843 = vmatpush1.msra.mxu0 0.0
    %844 = vmatprep.subr.mxu0 0.0
    %845 = vmatpush1.msra.mxu0 0.0
    %846 = vmatprep.subr.mxu0 0.0
    %847 = vmatpush1.msra.mxu0 0.0
    %848 = vmatprep.subr.mxu0 0.0
    %849 = vmatpush1.msra.mxu0 0.0
    %850 = vmatprep.mubr.f32.mxu0 0.0
    %851 = vmatmul.mubr.f32.gmra.mrb[0].mxu0 %v775
    %v852 = vpop.f32.mrb[0].mxu0
    %v853 = vadd.f32 0.0, %v852
    %v854 = vpop.f32.mrb[0].mxu0
    %v855 = vadd.f32 0.0, %v854
    %856 = vdwg.mxu0
    %857 = vmatprep.subr.mxu0 %v76
    %858 = vmatpush1.msra.mxu0 %v75
    %859 = vmatprep.subr.mxu0 %v80
    %860 = vmatpush1.msra.mxu0 %v79
    %861 = vmatprep.subr.mxu0 %v84
    %862 = vmatpush1.msra.mxu0 %v83
    %863 = vmatprep.subr.mxu0 %v88
    %864 = vmatpush1.msra.mxu0 %v87
    %865 = vmatprep.subr.mxu0 %v92
    %866 = vmatpush1.msra.mxu0 %v91
    %867 = vmatprep.subr.mxu0 %v96
    %868 = vmatpush1.msra.mxu0 %v95
    %869 = vmatprep.subr.mxu0 %v100
    %870 = vmatpush1.msra.mxu0 %v99
    %871 = vmatprep.subr.mxu0 %v104
    %872 = vmatpush1.msra.mxu0 %v103
    %873 = vmatprep.subr.mxu0 %v108
    %874 = vmatpush1.msra.mxu0 %v107
    %875 = vmatprep.subr.mxu0 %v112
    %876 = vmatpush1.msra.mxu0 %v111
    %877 = vmatprep.subr.mxu0 %v116
    %878 = vmatpush1.msra.mxu0 %v115
    %879 = vmatprep.subr.mxu0 %v120
    %880 = vmatpush1.msra.mxu0 %v119
    %881 = vmatprep.subr.mxu0 %v124
    %882 = vmatpush1.msra.mxu0 %v123
    %883 = vmatprep.subr.mxu0 %v128
    %884 = vmatpush1.msra.mxu0 %v127
    %885 = vmatprep.subr.mxu0 %v132
    %886 = vmatpush1.msra.mxu0 %v131
    %887 = vmatprep.subr.mxu0 %v136
    %888 = vmatpush1.msra.mxu0 %v135
    %889 = vmatprep.subr.mxu0 0.0
    %890 = vmatpush1.msra.mxu0 0.0
    %891 = vmatprep.subr.mxu0 0.0
    %892 = vmatpush1.msra.mxu0 0.0
    %893 = vmatprep.subr.mxu0 0.0
    %894 = vmatpush1.msra.mxu0 0.0
    %895 = vmatprep.subr.mxu0 0.0
    %896 = vmatpush1.msra.mxu0 0.0
    %897 = vmatprep.subr.mxu0 0.0
    %898 = vmatpush1.msra.mxu0 0.0
    %899 = vmatprep.subr.mxu0 0.0
    %900 = vmatpush1.msra.mxu0 0.0
    %901 = vmatprep.subr.mxu0 0.0
    %902 = vmatpush1.msra.mxu0 0.0
    %903 = vmatprep.subr.mxu0 0.0
    %904 = vmatpush1.msra.mxu0 0.0
    %905 = vmatprep.subr.mxu0 0.0
    %906 = vmatpush1.msra.mxu0 0.0
    %907 = vmatprep.subr.mxu0 0.0
    %908 = vmatpush1.msra.mxu0 0.0
    %909 = vmatprep.subr.mxu0 0.0
    %910 = vmatpush1.msra.mxu0 0.0
    %911 = vmatprep.subr.mxu0 0.0
    %912 = vmatpush1.msra.mxu0 0.0
    %913 = vmatprep.subr.mxu0 0.0
    %914 = vmatpush1.msra.mxu0 0.0
    %915 = vmatprep.subr.mxu0 0.0
    %916 = vmatpush1.msra.mxu0 0.0
    %917 = vmatprep.subr.mxu0 0.0
    %918 = vmatpush1.msra.mxu0 0.0
    %919 = vmatprep.subr.mxu0 0.0
    %920 = vmatpush1.msra.mxu0 0.0
    %921 = vmatprep.mubr.f32.mxu0 0.0
    %922 = vmatmul.mubr.f32.gmra.mrb[0].mxu0 %v775
    %v923 = vpop.f32.mrb[0].mxu0
    %v924 = vadd.f32 0.0, %v923
    %v925 = vpop.f32.mrb[0].mxu0
    %v926 = vadd.f32 0.0, %v925
    %927 = vdwg.mxu0
    %v932 = vcombine.low %v853, %v855
    %v933 = vcombine.low %v924, %v926
    %v935 = vunpack.c.l.s4 1966171168
    %v936 = vunpack.c.0.s8 %v935
    %v937 = vlaneseq
    %v938 = vshrl.u32 %v937, 7
    %v939 = vsub.s32 %v936, %v938
    %v940 = vrot.slane %v932, %v939
    %v942 = vunpack.c.l.s4 1966171168
    %v943 = vunpack.c.0.s8 %v942
    %v944 = vlaneseq
    %v945 = vshrl.u32 %v944, 7
    %v946 = vsub.s32 %v943, %v945
    %v947 = vrot.slane %v933, %v946
    %v948 = vcombine.low %v940, %v947
    %v950 = vunpack.c.l.s4 1966171168
    %v951 = vunpack.c.0.s8 %v950
    %v952 = vlaneseq
    %v953 = vshrl.u32 %v952, 7
    %v954 = vsub.s32 %v951, %v953
    %v955 = vrot.slane %v948, %v954
    %v957 = vadd.f32 %v785, %v955
    %v958 = vxor.u32 %v957, 2147483648
    %v959 = vmul.f32 %v958, 1.442695
    %v960 = vpow.pop %v959
    %v961 = vadd.f32 %v960, 1.0
    %v962 = vrcp.pop %v961
    %v963 = vmul.f32 1.0, %v962
    %v965 = vrot.slane %v957, 1
    %v967 = vxor.u32 %v965, 2147483648
    %v968 = vmul.f32 %v967, 1.442695
    %v969 = vpow.pop %v968
    %v970 = vadd.f32 %v969, 1.0
    %v971 = vrcp.pop %v970
    %v972 = vmul.f32 1.0, %v971
    %v973 = vrot.slane %v957, 2
    %v975 = vtanh.pop %v973
    %v976 = vrot.slane %v957, 3
    %v978 = vxor.u32 %v976, 2147483648
    %v979 = vmul.f32 %v978, 1.442695
    %v980 = vpow.pop %v979
    %v981 = vadd.f32 %v980, 1.0
    %v982 = vrcp.pop %v981
    %v983 = vmul.f32 1.0, %v982
    %v984 = vmul.f32 %v972, %v773
    %v985 = vmul.f32 %v963, %v975
    %v986 = vadd.f32 %v984, %v985
    %v987 = vtanh.pop %v986
    %v988 = vmul.f32 %v983, %v987
    %s989 = sld [smem:[#allocation2 + $0x4]]
    %s990 = sshra.s32 %s989, 3
    %s991 = sand.u32 %s989, 7
    %s992 = sshra.s32 %s989, 3
    %s993 = sand.u32 %s989, 7
    %s994 = smul.u32 %s990, 4
    %s995 = smul.u32 %s994, 8
    %s996 = sadd.s32 %s995, %s993
    %s997 = scalar_lea.vmem [#allocation6], %s996
    %v998 = vld [vmem:[%s997] ss:$8 sm:$0xf]
    %999 = vmatprep.subr.mxu0 %v74
    %1000 = vmatpush1.msra.mxu0 %v73
    %1001 = vmatprep.subr.mxu0 %v78
    %1002 = vmatpush1.msra.mxu0 %v77
    %1003 = vmatprep.subr.mxu0 %v82
    %1004 = vmatpush1.msra.mxu0 %v81
    %1005 = vmatprep.subr.mxu0 %v86
    %1006 = vmatpush1.msra.mxu0 %v85
    %1007 = vmatprep.subr.mxu0 %v90
    %1008 = vmatpush1.msra.mxu0 %v89
    %1009 = vmatprep.subr.mxu0 %v94
    %1010 = vmatpush1.msra.mxu0 %v93
    %1011 = vmatprep.subr.mxu0 %v98
    %1012 = vmatpush1.msra.mxu0 %v97
    %1013 = vmatprep.subr.mxu0 %v102
    %1014 = vmatpush1.msra.mxu0 %v101
    %1015 = vmatprep.subr.mxu0 %v106
    %1016 = vmatpush1.msra.mxu0 %v105
    %1017 = vmatprep.subr.mxu0 %v110
    %1018 = vmatpush1.msra.mxu0 %v109
    %1019 = vmatprep.subr.mxu0 %v114
    %1020 = vmatpush1.msra.mxu0 %v113
    %1021 = vmatprep.subr.mxu0 %v118
    %1022 = vmatpush1.msra.mxu0 %v117
    %1023 = vmatprep.subr.mxu0 %v122
    %1024 = vmatpush1.msra.mxu0 %v121
    %1025 = vmatprep.subr.mxu0 %v126
    %1026 = vmatpush1.msra.mxu0 %v125
    %1027 = vmatprep.subr.mxu0 %v130
    %1028 = vmatpush1.msra.mxu0 %v129
    %1029 = vmatprep.subr.mxu0 %v134
    %1030 = vmatpush1.msra.mxu0 %v133
    %1031 = vmatprep.subr.mxu0 0.0
    %1032 = vmatpush1.msra.mxu0 0.0
    %1033 = vmatprep.subr.mxu0 0.0
    %1034 = vmatpush1.msra.mxu0 0.0
    %1035 = vmatprep.subr.mxu0 0.0
    %1036 = vmatpush1.msra.mxu0 0.0
    %1037 = vmatprep.subr.mxu0 0.0
    %1038 = vmatpush1.msra.mxu0 0.0
    %1039 = vmatprep.subr.mxu0 0.0
    %1040 = vmatpush1.msra.mxu0 0.0
    %1041 = vmatprep.subr.mxu0 0.0
    %1042 = vmatpush1.msra.mxu0 0.0
    %1043 = vmatprep.subr.mxu0 0.0
    %1044 = vmatpush1.msra.mxu0 0.0
    %1045 = vmatprep.subr.mxu0 0.0
    %1046 = vmatpush1.msra.mxu0 0.0
    %1047 = vmatprep.subr.mxu0 0.0
    %1048 = vmatpush1.msra.mxu0 0.0
    %1049 = vmatprep.subr.mxu0 0.0
    %1050 = vmatpush1.msra.mxu0 0.0
    %1051 = vmatprep.subr.mxu0 0.0
    %1052 = vmatpush1.msra.mxu0 0.0
    %1053 = vmatprep.subr.mxu0 0.0
    %1054 = vmatpush1.msra.mxu0 0.0
    %1055 = vmatprep.subr.mxu0 0.0
    %1056 = vmatpush1.msra.mxu0 0.0
    %1057 = vmatprep.subr.mxu0 0.0
    %1058 = vmatpush1.msra.mxu0 0.0
    %1059 = vmatprep.subr.mxu0 0.0
    %1060 = vmatpush1.msra.mxu0 0.0
    %1061 = vmatprep.subr.mxu0 0.0
    %1062 = vmatpush1.msra.mxu0 0.0
    %1063 = vmatprep.mubr.f32.mxu0 0.0
    %1064 = vmatmul.mubr.f32.gmra.mrb[0].mxu0 %v988
    %v1065 = vpop.f32.mrb[0].mxu0
    %v1066 = vadd.f32 0.0, %v1065
    %v1067 = vpop.f32.mrb[0].mxu0
    %v1068 = vadd.f32 0.0, %v1067
    %1069 = vdwg.mxu0
    %1070 = vmatprep.subr.mxu0 %v76
    %1071 = vmatpush1.msra.mxu0 %v75
    %1072 = vmatprep.subr.mxu0 %v80
    %1073 = vmatpush1.msra.mxu0 %v79
    %1074 = vmatprep.subr.mxu0 %v84
    %1075 = vmatpush1.msra.mxu0 %v83
    %1076 = vmatprep.subr.mxu0 %v88
    %1077 = vmatpush1.msra.mxu0 %v87
    %1078 = vmatprep.subr.mxu0 %v92
    %1079 = vmatpush1.msra.mxu0 %v91
    %1080 = vmatprep.subr.mxu0 %v96
    %1081 = vmatpush1.msra.mxu0 %v95
    %1082 = vmatprep.subr.mxu0 %v100
    %1083 = vmatpush1.msra.mxu0 %v99
    %1084 = vmatprep.subr.mxu0 %v104
    %1085 = vmatpush1.msra.mxu0 %v103
    %1086 = vmatprep.subr.mxu0 %v108
    %1087 = vmatpush1.msra.mxu0 %v107
    %1088 = vmatprep.subr.mxu0 %v112
    %1089 = vmatpush1.msra.mxu0 %v111
    %1090 = vmatprep.subr.mxu0 %v116
    %1091 = vmatpush1.msra.mxu0 %v115
    %1092 = vmatprep.subr.mxu0 %v120
    %1093 = vmatpush1.msra.mxu0 %v119
    %1094 = vmatprep.subr.mxu0 %v124
    %1095 = vmatpush1.msra.mxu0 %v123
    %1096 = vmatprep.subr.mxu0 %v128
    %1097 = vmatpush1.msra.mxu0 %v127
    %1098 = vmatprep.subr.mxu0 %v132
    %1099 = vmatpush1.msra.mxu0 %v131
    %1100 = vmatprep.subr.mxu0 %v136
    %1101 = vmatpush1.msra.mxu0 %v135
    %1102 = vmatprep.subr.mxu0 0.0
    %1103 = vmatpush1.msra.mxu0 0.0
    %1104 = vmatprep.subr.mxu0 0.0
    %1105 = vmatpush1.msra.mxu0 0.0
    %1106 = vmatprep.subr.mxu0 0.0
    %1107 = vmatpush1.msra.mxu0 0.0
    %1108 = vmatprep.subr.mxu0 0.0
    %1109 = vmatpush1.msra.mxu0 0.0
    %1110 = vmatprep.subr.mxu0 0.0
    %1111 = vmatpush1.msra.mxu0 0.0
    %1112 = vmatprep.subr.mxu0 0.0
    %1113 = vmatpush1.msra.mxu0 0.0
    %1114 = vmatprep.subr.mxu0 0.0
    %1115 = vmatpush1.msra.mxu0 0.0
    %1116 = vmatprep.subr.mxu0 0.0
    %1117 = vmatpush1.msra.mxu0 0.0
    %1118 = vmatprep.subr.mxu0 0.0
    %1119 = vmatpush1.msra.mxu0 0.0
    %1120 = vmatprep.subr.mxu0 0.0
    %1121 = vmatpush1.msra.mxu0 0.0
    %1122 = vmatprep.subr.mxu0 0.0
    %1123 = vmatpush1.msra.mxu0 0.0
    %1124 = vmatprep.subr.mxu0 0.0
    %1125 = vmatpush1.msra.mxu0 0.0
    %1126 = vmatprep.subr.mxu0 0.0
    %1127 = vmatpush1.msra.mxu0 0.0
    %1128 = vmatprep.subr.mxu0 0.0
    %1129 = vmatpush1.msra.mxu0 0.0
    %1130 = vmatprep.subr.mxu0 0.0
    %1131 = vmatpush1.msra.mxu0 0.0
    %1132 = vmatprep.subr.mxu0 0.0
    %1133 = vmatpush1.msra.mxu0 0.0
    %1134 = vmatprep.mubr.f32.mxu0 0.0
    %1135 = vmatmul.mubr.f32.gmra.mrb[0].mxu0 %v988
    %v1136 = vpop.f32.mrb[0].mxu0
    %v1137 = vadd.f32 0.0, %v1136
    %v1138 = vpop.f32.mrb[0].mxu0
    %v1139 = vadd.f32 0.0, %v1138
    %1140 = vdwg.mxu0
    %v1145 = vcombine.low %v1066, %v1068
    %v1146 = vcombine.low %v1137, %v1139
    %v1148 = vunpack.c.l.s4 1966171168
    %v1149 = vunpack.c.0.s8 %v1148
    %v1150 = vlaneseq
    %v1151 = vshrl.u32 %v1150, 7
    %v1152 = vsub.s32 %v1149, %v1151
    %v1153 = vrot.slane %v1145, %v1152
    %v1155 = vunpack.c.l.s4 1966171168
    %v1156 = vunpack.c.0.s8 %v1155
    %v1157 = vlaneseq
    %v1158 = vshrl.u32 %v1157, 7
    %v1159 = vsub.s32 %v1156, %v1158
    %v1160 = vrot.slane %v1146, %v1159
    %v1161 = vcombine.low %v1153, %v1160
    %v1163 = vunpack.c.l.s4 1966171168
    %v1164 = vunpack.c.0.s8 %v1163
    %v1165 = vlaneseq
    %v1166 = vshrl.u32 %v1165, 7
    %v1167 = vsub.s32 %v1164, %v1166
    %v1168 = vrot.slane %v1161, %v1167
    %v1170 = vadd.f32 %v998, %v1168
    %v1171 = vxor.u32 %v1170, 2147483648
    %v1172 = vmul.f32 %v1171, 1.442695
    %v1173 = vpow.pop %v1172
    %v1174 = vadd.f32 %v1173, 1.0
    %v1175 = vrcp.pop %v1174
    %v1176 = vmul.f32 1.0, %v1175
    %v1178 = vrot.slane %v1170, 1
    %v1180 = vxor.u32 %v1178, 2147483648
    %v1181 = vmul.f32 %v1180, 1.442695
    %v1182 = vpow.pop %v1181
    %v1183 = vadd.f32 %v1182, 1.0
    %v1184 = vrcp.pop %v1183
    %v1185 = vmul.f32 1.0, %v1184
    %v1186 = vrot.slane %v1170, 2
    %v1188 = vtanh.pop %v1186
    %v1189 = vrot.slane %v1170, 3
    %v1191 = vxor.u32 %v1189, 2147483648
    %v1192 = vmul.f32 %v1191, 1.442695
    %v1193 = vpow.pop %v1192
    %v1194 = vadd.f32 %v1193, 1.0
    %v1195 = vrcp.pop %v1194
    %v1196 = vmul.f32 1.0, %v1195
    %v1197 = vmul.f32 %v1185, %v986
    %v1198 = vmul.f32 %v1176, %v1188
    %v1199 = vadd.f32 %v1197, %v1198
    %v1200 = vtanh.pop %v1199
    %v1201 = vmul.f32 %v1196, %v1200
    %s1202 = sld [smem:[#allocation2 + $0x5]]
    %s1203 = sshra.s32 %s1202, 3
    %s1204 = sand.u32 %s1202, 7
    %s1205 = sshra.s32 %s1202, 3
    %s1206 = sand.u32 %s1202, 7
    %s1207 = smul.u32 %s1203, 4
    %s1208 = smul.u32 %s1207, 8
    %s1209 = sadd.s32 %s1208, %s1206
    %s1210 = scalar_lea.vmem [#allocation6], %s1209
    %v1211 = vld [vmem:[%s1210] ss:$8 sm:$0xf]
    %1212 = vmatprep.subr.mxu0 %v74
    %1213 = vmatpush1.msra.mxu0 %v73
    %1214 = vmatprep.subr.mxu0 %v78
    %1215 = vmatpush1.msra.mxu0 %v77
    %1216 = vmatprep.subr.mxu0 %v82
    %1217 = vmatpush1.msra.mxu0 %v81
    %1218 = vmatprep.subr.mxu0 %v86
    %1219 = vmatpush1.msra.mxu0 %v85
    %1220 = vmatprep.subr.mxu0 %v90
    %1221 = vmatpush1.msra.mxu0 %v89
    %1222 = vmatprep.subr.mxu0 %v94
    %1223 = vmatpush1.msra.mxu0 %v93
    %1224 = vmatprep.subr.mxu0 %v98
    %1225 = vmatpush1.msra.mxu0 %v97
    %1226 = vmatprep.subr.mxu0 %v102
    %1227 = vmatpush1.msra.mxu0 %v101
    %1228 = vmatprep.subr.mxu0 %v106
    %1229 = vmatpush1.msra.mxu0 %v105
    %1230 = vmatprep.subr.mxu0 %v110
    %1231 = vmatpush1.msra.mxu0 %v109
    %1232 = vmatprep.subr.mxu0 %v114
    %1233 = vmatpush1.msra.mxu0 %v113
    %1234 = vmatprep.subr.mxu0 %v118
    %1235 = vmatpush1.msra.mxu0 %v117
    %1236 = vmatprep.subr.mxu0 %v122
    %1237 = vmatpush1.msra.mxu0 %v121
    %1238 = vmatprep.subr.mxu0 %v126
    %1239 = vmatpush1.msra.mxu0 %v125
    %1240 = vmatprep.subr.mxu0 %v130
    %1241 = vmatpush1.msra.mxu0 %v129
    %1242 = vmatprep.subr.mxu0 %v134
    %1243 = vmatpush1.msra.mxu0 %v133
    %1244 = vmatprep.subr.mxu0 0.0
    %1245 = vmatpush1.msra.mxu0 0.0
    %1246 = vmatprep.subr.mxu0 0.0
    %1247 = vmatpush1.msra.mxu0 0.0
    %1248 = vmatprep.subr.mxu0 0.0
    %1249 = vmatpush1.msra.mxu0 0.0
    %1250 = vmatprep.subr.mxu0 0.0
    %1251 = vmatpush1.msra.mxu0 0.0
    %1252 = vmatprep.subr.mxu0 0.0
    %1253 = vmatpush1.msra.mxu0 0.0
    %1254 = vmatprep.subr.mxu0 0.0
    %1255 = vmatpush1.msra.mxu0 0.0
    %1256 = vmatprep.subr.mxu0 0.0
    %1257 = vmatpush1.msra.mxu0 0.0
    %1258 = vmatprep.subr.mxu0 0.0
    %1259 = vmatpush1.msra.mxu0 0.0
    %1260 = vmatprep.subr.mxu0 0.0
    %1261 = vmatpush1.msra.mxu0 0.0
    %1262 = vmatprep.subr.mxu0 0.0
    %1263 = vmatpush1.msra.mxu0 0.0
    %1264 = vmatprep.subr.mxu0 0.0
    %1265 = vmatpush1.msra.mxu0 0.0
    %1266 = vmatprep.subr.mxu0 0.0
    %1267 = vmatpush1.msra.mxu0 0.0
    %1268 = vmatprep.subr.mxu0 0.0
    %1269 = vmatpush1.msra.mxu0 0.0
    %1270 = vmatprep.subr.mxu0 0.0
    %1271 = vmatpush1.msra.mxu0 0.0
    %1272 = vmatprep.subr.mxu0 0.0
    %1273 = vmatpush1.msra.mxu0 0.0
    %1274 = vmatprep.subr.mxu0 0.0
    %1275 = vmatpush1.msra.mxu0 0.0
    %1276 = vmatprep.mubr.f32.mxu0 0.0
    %1277 = vmatmul.mubr.f32.gmra.mrb[0].mxu0 %v1201
    %v1278 = vpop.f32.mrb[0].mxu0
    %v1279 = vadd.f32 0.0, %v1278
    %v1280 = vpop.f32.mrb[0].mxu0
    %v1281 = vadd.f32 0.0, %v1280
    %1282 = vdwg.mxu0
    %1283 = vmatprep.subr.mxu0 %v76
    %1284 = vmatpush1.msra.mxu0 %v75
    %1285 = vmatprep.subr.mxu0 %v80
    %1286 = vmatpush1.msra.mxu0 %v79
    %1287 = vmatprep.subr.mxu0 %v84
    %1288 = vmatpush1.msra.mxu0 %v83
    %1289 = vmatprep.subr.mxu0 %v88
    %1290 = vmatpush1.msra.mxu0 %v87
    %1291 = vmatprep.subr.mxu0 %v92
    %1292 = vmatpush1.msra.mxu0 %v91
    %1293 = vmatprep.subr.mxu0 %v96
    %1294 = vmatpush1.msra.mxu0 %v95
    %1295 = vmatprep.subr.mxu0 %v100
    %1296 = vmatpush1.msra.mxu0 %v99
    %1297 = vmatprep.subr.mxu0 %v104
    %1298 = vmatpush1.msra.mxu0 %v103
    %1299 = vmatprep.subr.mxu0 %v108
    %1300 = vmatpush1.msra.mxu0 %v107
    %1301 = vmatprep.subr.mxu0 %v112
    %1302 = vmatpush1.msra.mxu0 %v111
    %1303 = vmatprep.subr.mxu0 %v116
    %1304 = vmatpush1.msra.mxu0 %v115
    %1305 = vmatprep.subr.mxu0 %v120
    %1306 = vmatpush1.msra.mxu0 %v119
    %1307 = vmatprep.subr.mxu0 %v124
    %1308 = vmatpush1.msra.mxu0 %v123
    %1309 = vmatprep.subr.mxu0 %v128
    %1310 = vmatpush1.msra.mxu0 %v127
    %1311 = vmatprep.subr.mxu0 %v132
    %1312 = vmatpush1.msra.mxu0 %v131
    %1313 = vmatprep.subr.mxu0 %v136
    %1314 = vmatpush1.msra.mxu0 %v135
    %1315 = vmatprep.subr.mxu0 0.0
    %1316 = vmatpush1.msra.mxu0 0.0
    %1317 = vmatprep.subr.mxu0 0.0
    %1318 = vmatpush1.msra.mxu0 0.0
    %1319 = vmatprep.subr.mxu0 0.0
    %1320 = vmatpush1.msra.mxu0 0.0
    %1321 = vmatprep.subr.mxu0 0.0
    %1322 = vmatpush1.msra.mxu0 0.0
    %1323 = vmatprep.subr.mxu0 0.0
    %1324 = vmatpush1.msra.mxu0 0.0
    %1325 = vmatprep.subr.mxu0 0.0
    %1326 = vmatpush1.msra.mxu0 0.0
    %1327 = vmatprep.subr.mxu0 0.0
    %1328 = vmatpush1.msra.mxu0 0.0
    %1329 = vmatprep.subr.mxu0 0.0
    %1330 = vmatpush1.msra.mxu0 0.0
    %1331 = vmatprep.subr.mxu0 0.0
    %1332 = vmatpush1.msra.mxu0 0.0
    %1333 = vmatprep.subr.mxu0 0.0
    %1334 = vmatpush1.msra.mxu0 0.0
    %1335 = vmatprep.subr.mxu0 0.0
    %1336 = vmatpush1.msra.mxu0 0.0
    %1337 = vmatprep.subr.mxu0 0.0
    %1338 = vmatpush1.msra.mxu0 0.0
    %1339 = vmatprep.subr.mxu0 0.0
    %1340 = vmatpush1.msra.mxu0 0.0
    %1341 = vmatprep.subr.mxu0 0.0
    %1342 = vmatpush1.msra.mxu0 0.0
    %1343 = vmatprep.subr.mxu0 0.0
    %1344 = vmatpush1.msra.mxu0 0.0
    %1345 = vmatprep.subr.mxu0 0.0
    %1346 = vmatpush1.msra.mxu0 0.0
    %1347 = vmatprep.mubr.f32.mxu0 0.0
    %1348 = vmatmul.mubr.f32.gmra.mrb[0].mxu0 %v1201
    %v1349 = vpop.f32.mrb[0].mxu0
    %v1350 = vadd.f32 0.0, %v1349
    %v1351 = vpop.f32.mrb[0].mxu0
    %v1352 = vadd.f32 0.0, %v1351
    %1353 = vdwg.mxu0
    %v1358 = vcombine.low %v1279, %v1281
    %v1359 = vcombine.low %v1350, %v1352
    %v1361 = vunpack.c.l.s4 1966171168
    %v1362 = vunpack.c.0.s8 %v1361
    %v1363 = vlaneseq
    %v1364 = vshrl.u32 %v1363, 7
    %v1365 = vsub.s32 %v1362, %v1364
    %v1366 = vrot.slane %v1358, %v1365
    %v1368 = vunpack.c.l.s4 1966171168
    %v1369 = vunpack.c.0.s8 %v1368
    %v1370 = vlaneseq
    %v1371 = vshrl.u32 %v1370, 7
    %v1372 = vsub.s32 %v1369, %v1371
    %v1373 = vrot.slane %v1359, %v1372
    %v1374 = vcombine.low %v1366, %v1373
    %v1376 = vunpack.c.l.s4 1966171168
    %v1377 = vunpack.c.0.s8 %v1376
    %v1378 = vlaneseq
    %v1379 = vshrl.u32 %v1378, 7
    %v1380 = vsub.s32 %v1377, %v1379
    %v1381 = vrot.slane %v1374, %v1380
    %v1383 = vadd.f32 %v1211, %v1381
    %v1384 = vxor.u32 %v1383, 2147483648
    %v1385 = vmul.f32 %v1384, 1.442695
    %v1386 = vpow.pop %v1385
    %v1387 = vadd.f32 %v1386, 1.0
    %v1388 = vrcp.pop %v1387
    %v1389 = vmul.f32 1.0, %v1388
    %v1391 = vrot.slane %v1383, 1
    %v1393 = vxor.u32 %v1391, 2147483648
    %v1394 = vmul.f32 %v1393, 1.442695
    %v1395 = vpow.pop %v1394
    %v1396 = vadd.f32 %v1395, 1.0
    %v1397 = vrcp.pop %v1396
    %v1398 = vmul.f32 1.0, %v1397
    %v1399 = vrot.slane %v1383, 2
    %v1401 = vtanh.pop %v1399
    %v1402 = vrot.slane %v1383, 3
    %v1404 = vxor.u32 %v1402, 2147483648
    %v1405 = vmul.f32 %v1404, 1.442695
    %v1406 = vpow.pop %v1405
    %v1407 = vadd.f32 %v1406, 1.0
    %v1408 = vrcp.pop %v1407
    %v1409 = vmul.f32 1.0, %v1408
    %v1410 = vmul.f32 %v1398, %v1199
    %v1411 = vmul.f32 %v1389, %v1401
    %v1412 = vadd.f32 %v1410, %v1411
    %v1413 = vtanh.pop %v1412
    %v1414 = vmul.f32 %v1409, %v1413
    %s1415 = sld [smem:[#allocation2 + $0x6]]
    %s1416 = sshra.s32 %s1415, 3
    %s1417 = sand.u32 %s1415, 7
    %s1418 = sshra.s32 %s1415, 3
    %s1419 = sand.u32 %s1415, 7
    %s1420 = smul.u32 %s1416, 4
    %s1421 = smul.u32 %s1420, 8
    %s1422 = sadd.s32 %s1421, %s1419
    %s1423 = scalar_lea.vmem [#allocation6], %s1422
    %v1424 = vld [vmem:[%s1423] ss:$8 sm:$0xf]
    %1425 = vmatprep.subr.mxu0 %v74
    %1426 = vmatpush1.msra.mxu0 %v73
    %1427 = vmatprep.subr.mxu0 %v78
    %1428 = vmatpush1.msra.mxu0 %v77
    %1429 = vmatprep.subr.mxu0 %v82
    %1430 = vmatpush1.msra.mxu0 %v81
    %1431 = vmatprep.subr.mxu0 %v86
    %1432 = vmatpush1.msra.mxu0 %v85
    %1433 = vmatprep.subr.mxu0 %v90
    %1434 = vmatpush1.msra.mxu0 %v89
    %1435 = vmatprep.subr.mxu0 %v94
    %1436 = vmatpush1.msra.mxu0 %v93
    %1437 = vmatprep.subr.mxu0 %v98
    %1438 = vmatpush1.msra.mxu0 %v97
    %1439 = vmatprep.subr.mxu0 %v102
    %1440 = vmatpush1.msra.mxu0 %v101
    %1441 = vmatprep.subr.mxu0 %v106
    %1442 = vmatpush1.msra.mxu0 %v105
    %1443 = vmatprep.subr.mxu0 %v110
    %1444 = vmatpush1.msra.mxu0 %v109
    %1445 = vmatprep.subr.mxu0 %v114
    %1446 = vmatpush1.msra.mxu0 %v113
    %1447 = vmatprep.subr.mxu0 %v118
    %1448 = vmatpush1.msra.mxu0 %v117
    %1449 = vmatprep.subr.mxu0 %v122
    %1450 = vmatpush1.msra.mxu0 %v121
    %1451 = vmatprep.subr.mxu0 %v126
    %1452 = vmatpush1.msra.mxu0 %v125
    %1453 = vmatprep.subr.mxu0 %v130
    %1454 = vmatpush1.msra.mxu0 %v129
    %1455 = vmatprep.subr.mxu0 %v134
    %1456 = vmatpush1.msra.mxu0 %v133
    %1457 = vmatprep.subr.mxu0 0.0
    %1458 = vmatpush1.msra.mxu0 0.0
    %1459 = vmatprep.subr.mxu0 0.0
    %1460 = vmatpush1.msra.mxu0 0.0
    %1461 = vmatprep.subr.mxu0 0.0
    %1462 = vmatpush1.msra.mxu0 0.0
    %1463 = vmatprep.subr.mxu0 0.0
    %1464 = vmatpush1.msra.mxu0 0.0
    %1465 = vmatprep.subr.mxu0 0.0
    %1466 = vmatpush1.msra.mxu0 0.0
    %1467 = vmatprep.subr.mxu0 0.0
    %1468 = vmatpush1.msra.mxu0 0.0
    %1469 = vmatprep.subr.mxu0 0.0
    %1470 = vmatpush1.msra.mxu0 0.0
    %1471 = vmatprep.subr.mxu0 0.0
    %1472 = vmatpush1.msra.mxu0 0.0
    %1473 = vmatprep.subr.mxu0 0.0
    %1474 = vmatpush1.msra.mxu0 0.0
    %1475 = vmatprep.subr.mxu0 0.0
    %1476 = vmatpush1.msra.mxu0 0.0
    %1477 = vmatprep.subr.mxu0 0.0
    %1478 = vmatpush1.msra.mxu0 0.0
    %1479 = vmatprep.subr.mxu0 0.0
    %1480 = vmatpush1.msra.mxu0 0.0
    %1481 = vmatprep.subr.mxu0 0.0
    %1482 = vmatpush1.msra.mxu0 0.0
    %1483 = vmatprep.subr.mxu0 0.0
    %1484 = vmatpush1.msra.mxu0 0.0
    %1485 = vmatprep.subr.mxu0 0.0
    %1486 = vmatpush1.msra.mxu0 0.0
    %1487 = vmatprep.subr.mxu0 0.0
    %1488 = vmatpush1.msra.mxu0 0.0
    %1489 = vmatprep.mubr.f32.mxu0 0.0
    %1490 = vmatmul.mubr.f32.gmra.mrb[0].mxu0 %v1414
    %v1491 = vpop.f32.mrb[0].mxu0
    %v1492 = vadd.f32 0.0, %v1491
    %v1493 = vpop.f32.mrb[0].mxu0
    %v1494 = vadd.f32 0.0, %v1493
    %1495 = vdwg.mxu0
    %1496 = vmatprep.subr.mxu0 %v76
    %1497 = vmatpush1.msra.mxu0 %v75
    %1498 = vmatprep.subr.mxu0 %v80
    %1499 = vmatpush1.msra.mxu0 %v79
    %1500 = vmatprep.subr.mxu0 %v84
    %1501 = vmatpush1.msra.mxu0 %v83
    %1502 = vmatprep.subr.mxu0 %v88
    %1503 = vmatpush1.msra.mxu0 %v87
    %1504 = vmatprep.subr.mxu0 %v92
    %1505 = vmatpush1.msra.mxu0 %v91
    %1506 = vmatprep.subr.mxu0 %v96
    %1507 = vmatpush1.msra.mxu0 %v95
    %1508 = vmatprep.subr.mxu0 %v100
    %1509 = vmatpush1.msra.mxu0 %v99
    %1510 = vmatprep.subr.mxu0 %v104
    %1511 = vmatpush1.msra.mxu0 %v103
    %1512 = vmatprep.subr.mxu0 %v108
    %1513 = vmatpush1.msra.mxu0 %v107
    %1514 = vmatprep.subr.mxu0 %v112
    %1515 = vmatpush1.msra.mxu0 %v111
    %1516 = vmatprep.subr.mxu0 %v116
    %1517 = vmatpush1.msra.mxu0 %v115
    %1518 = vmatprep.subr.mxu0 %v120
    %1519 = vmatpush1.msra.mxu0 %v119
    %1520 = vmatprep.subr.mxu0 %v124
    %1521 = vmatpush1.msra.mxu0 %v123
    %1522 = vmatprep.subr.mxu0 %v128
    %1523 = vmatpush1.msra.mxu0 %v127
    %1524 = vmatprep.subr.mxu0 %v132
    %1525 = vmatpush1.msra.mxu0 %v131
    %1526 = vmatprep.subr.mxu0 %v136
    %1527 = vmatpush1.msra.mxu0 %v135
    %1528 = vmatprep.subr.mxu0 0.0
    %1529 = vmatpush1.msra.mxu0 0.0
    %1530 = vmatprep.subr.mxu0 0.0
    %1531 = vmatpush1.msra.mxu0 0.0
    %1532 = vmatprep.subr.mxu0 0.0
    %1533 = vmatpush1.msra.mxu0 0.0
    %1534 = vmatprep.subr.mxu0 0.0
    %1535 = vmatpush1.msra.mxu0 0.0
    %1536 = vmatprep.subr.mxu0 0.0
    %1537 = vmatpush1.msra.mxu0 0.0
    %1538 = vmatprep.subr.mxu0 0.0
    %1539 = vmatpush1.msra.mxu0 0.0
    %1540 = vmatprep.subr.mxu0 0.0
    %1541 = vmatpush1.msra.mxu0 0.0
    %1542 = vmatprep.subr.mxu0 0.0
    %1543 = vmatpush1.msra.mxu0 0.0
    %1544 = vmatprep.subr.mxu0 0.0
    %1545 = vmatpush1.msra.mxu0 0.0
    %1546 = vmatprep.subr.mxu0 0.0
    %1547 = vmatpush1.msra.mxu0 0.0
    %1548 = vmatprep.subr.mxu0 0.0
    %1549 = vmatpush1.msra.mxu0 0.0
    %1550 = vmatprep.subr.mxu0 0.0
    %1551 = vmatpush1.msra.mxu0 0.0
    %1552 = vmatprep.subr.mxu0 0.0
    %1553 = vmatpush1.msra.mxu0 0.0
    %1554 = vmatprep.subr.mxu0 0.0
    %1555 = vmatpush1.msra.mxu0 0.0
    %1556 = vmatprep.subr.mxu0 0.0
    %1557 = vmatpush1.msra.mxu0 0.0
    %1558 = vmatprep.subr.mxu0 0.0
    %1559 = vmatpush1.msra.mxu0 0.0
    %1560 = vmatprep.mubr.f32.mxu0 0.0
    %1561 = vmatmul.mubr.f32.gmra.mrb[0].mxu0 %v1414
    %v1562 = vpop.f32.mrb[0].mxu0
    %v1563 = vadd.f32 0.0, %v1562
    %v1564 = vpop.f32.mrb[0].mxu0
    %v1565 = vadd.f32 0.0, %v1564
    %1566 = vdwg.mxu0
    %v1571 = vcombine.low %v1492, %v1494
    %v1572 = vcombine.low %v1563, %v1565
    %v1574 = vunpack.c.l.s4 1966171168
    %v1575 = vunpack.c.0.s8 %v1574
    %v1576 = vlaneseq
    %v1577 = vshrl.u32 %v1576, 7
    %v1578 = vsub.s32 %v1575, %v1577
    %v1579 = vrot.slane %v1571, %v1578
    %v1581 = vunpack.c.l.s4 1966171168
    %v1582 = vunpack.c.0.s8 %v1581
    %v1583 = vlaneseq
    %v1584 = vshrl.u32 %v1583, 7
    %v1585 = vsub.s32 %v1582, %v1584
    %v1586 = vrot.slane %v1572, %v1585
    %v1587 = vcombine.low %v1579, %v1586
    %v1589 = vunpack.c.l.s4 1966171168
    %v1590 = vunpack.c.0.s8 %v1589
    %v1591 = vlaneseq
    %v1592 = vshrl.u32 %v1591, 7
    %v1593 = vsub.s32 %v1590, %v1592
    %v1594 = vrot.slane %v1587, %v1593
    %v1596 = vadd.f32 %v1424, %v1594
    %v1597 = vxor.u32 %v1596, 2147483648
    %v1598 = vmul.f32 %v1597, 1.442695
    %v1599 = vpow.pop %v1598
    %v1600 = vadd.f32 %v1599, 1.0
    %v1601 = vrcp.pop %v1600
    %v1602 = vmul.f32 1.0, %v1601
    %v1604 = vrot.slane %v1596, 1
    %v1606 = vxor.u32 %v1604, 2147483648
    %v1607 = vmul.f32 %v1606, 1.442695
    %v1608 = vpow.pop %v1607
    %v1609 = vadd.f32 %v1608, 1.0
    %v1610 = vrcp.pop %v1609
    %v1611 = vmul.f32 1.0, %v1610
    %v1612 = vrot.slane %v1596, 2
    %v1614 = vtanh.pop %v1612
    %v1615 = vrot.slane %v1596, 3
    %v1617 = vxor.u32 %v1615, 2147483648
    %v1618 = vmul.f32 %v1617, 1.442695
    %v1619 = vpow.pop %v1618
    %v1620 = vadd.f32 %v1619, 1.0
    %v1621 = vrcp.pop %v1620
    %v1622 = vmul.f32 1.0, %v1621
    %v1623 = vmul.f32 %v1611, %v1412
    %v1624 = vmul.f32 %v1602, %v1614
    %v1625 = vadd.f32 %v1623, %v1624
    %v1626 = vtanh.pop %v1625
    %v1627 = vmul.f32 %v1622, %v1626
    %s1628 = sld [smem:[#allocation2 + $0x7]]
    %s1629 = sshra.s32 %s1628, 3
    %s1630 = sand.u32 %s1628, 7
    %s1631 = sshra.s32 %s1628, 3
    %s1632 = sand.u32 %s1628, 7
    %s1633 = smul.u32 %s1629, 4
    %s1634 = smul.u32 %s1633, 8
    %s1635 = sadd.s32 %s1634, %s1632
    %s1636 = scalar_lea.vmem [#allocation6], %s1635
    %v1637 = vld [vmem:[%s1636] ss:$8 sm:$0xf]
    %1638 = vmatprep.subr.mxu0 %v74
    %1639 = vmatpush1.msra.mxu0 %v73
    %1640 = vmatprep.subr.mxu0 %v78
    %1641 = vmatpush1.msra.mxu0 %v77
    %1642 = vmatprep.subr.mxu0 %v82
    %1643 = vmatpush1.msra.mxu0 %v81
    %1644 = vmatprep.subr.mxu0 %v86
    %1645 = vmatpush1.msra.mxu0 %v85
    %1646 = vmatprep.subr.mxu0 %v90
    %1647 = vmatpush1.msra.mxu0 %v89
    %1648 = vmatprep.subr.mxu0 %v94
    %1649 = vmatpush1.msra.mxu0 %v93
    %1650 = vmatprep.subr.mxu0 %v98
    %1651 = vmatpush1.msra.mxu0 %v97
    %1652 = vmatprep.subr.mxu0 %v102
    %1653 = vmatpush1.msra.mxu0 %v101
    %1654 = vmatprep.subr.mxu0 %v106
    %1655 = vmatpush1.msra.mxu0 %v105
    %1656 = vmatprep.subr.mxu0 %v110
    %1657 = vmatpush1.msra.mxu0 %v109
    %1658 = vmatprep.subr.mxu0 %v114
    %1659 = vmatpush1.msra.mxu0 %v113
    %1660 = vmatprep.subr.mxu0 %v118
    %1661 = vmatpush1.msra.mxu0 %v117
    %1662 = vmatprep.subr.mxu0 %v122
    %1663 = vmatpush1.msra.mxu0 %v121
    %1664 = vmatprep.subr.mxu0 %v126
    %1665 = vmatpush1.msra.mxu0 %v125
    %1666 = vmatprep.subr.mxu0 %v130
    %1667 = vmatpush1.msra.mxu0 %v129
    %1668 = vmatprep.subr.mxu0 %v134
    %1669 = vmatpush1.msra.mxu0 %v133
    %1670 = vmatprep.subr.mxu0 0.0
    %1671 = vmatpush1.msra.mxu0 0.0
    %1672 = vmatprep.subr.mxu0 0.0
    %1673 = vmatpush1.msra.mxu0 0.0
    %1674 = vmatprep.subr.mxu0 0.0
    %1675 = vmatpush1.msra.mxu0 0.0
    %1676 = vmatprep.subr.mxu0 0.0
    %1677 = vmatpush1.msra.mxu0 0.0
    %1678 = vmatprep.subr.mxu0 0.0
    %1679 = vmatpush1.msra.mxu0 0.0
    %1680 = vmatprep.subr.mxu0 0.0
    %1681 = vmatpush1.msra.mxu0 0.0
    %1682 = vmatprep.subr.mxu0 0.0
    %1683 = vmatpush1.msra.mxu0 0.0
    %1684 = vmatprep.subr.mxu0 0.0
    %1685 = vmatpush1.msra.mxu0 0.0
    %1686 = vmatprep.subr.mxu0 0.0
    %1687 = vmatpush1.msra.mxu0 0.0
    %1688 = vmatprep.subr.mxu0 0.0
    %1689 = vmatpush1.msra.mxu0 0.0
    %1690 = vmatprep.subr.mxu0 0.0
    %1691 = vmatpush1.msra.mxu0 0.0
    %1692 = vmatprep.subr.mxu0 0.0
    %1693 = vmatpush1.msra.mxu0 0.0
    %1694 = vmatprep.subr.mxu0 0.0
    %1695 = vmatpush1.msra.mxu0 0.0
    %1696 = vmatprep.subr.mxu0 0.0
    %1697 = vmatpush1.msra.mxu0 0.0
    %1698 = vmatprep.subr.mxu0 0.0
    %1699 = vmatpush1.msra.mxu0 0.0
    %1700 = vmatprep.subr.mxu0 0.0
    %1701 = vmatpush1.msra.mxu0 0.0
    %1702 = vmatprep.mubr.f32.mxu0 0.0
    %1703 = vmatmul.mubr.f32.gmra.mrb[0].mxu0 %v1627
    %v1704 = vpop.f32.mrb[0].mxu0
    %v1705 = vadd.f32 0.0, %v1704
    %v1706 = vpop.f32.mrb[0].mxu0
    %v1707 = vadd.f32 0.0, %v1706
    %1708 = vdwg.mxu0
    %1709 = vmatprep.subr.mxu0 %v76
    %1710 = vmatpush1.msra.mxu0 %v75
    %1711 = vmatprep.subr.mxu0 %v80
    %1712 = vmatpush1.msra.mxu0 %v79
    %1713 = vmatprep.subr.mxu0 %v84
    %1714 = vmatpush1.msra.mxu0 %v83
    %1715 = vmatprep.subr.mxu0 %v88
    %1716 = vmatpush1.msra.mxu0 %v87
    %1717 = vmatprep.subr.mxu0 %v92
    %1718 = vmatpush1.msra.mxu0 %v91
    %1719 = vmatprep.subr.mxu0 %v96
    %1720 = vmatpush1.msra.mxu0 %v95
    %1721 = vmatprep.subr.mxu0 %v100
    %1722 = vmatpush1.msra.mxu0 %v99
    %1723 = vmatprep.subr.mxu0 %v104
    %1724 = vmatpush1.msra.mxu0 %v103
    %1725 = vmatprep.subr.mxu0 %v108
    %1726 = vmatpush1.msra.mxu0 %v107
    %1727 = vmatprep.subr.mxu0 %v112
    %1728 = vmatpush1.msra.mxu0 %v111
    %1729 = vmatprep.subr.mxu0 %v116
    %1730 = vmatpush1.msra.mxu0 %v115
    %1731 = vmatprep.subr.mxu0 %v120
    %1732 = vmatpush1.msra.mxu0 %v119
    %1733 = vmatprep.subr.mxu0 %v124
    %1734 = vmatpush1.msra.mxu0 %v123
    %1735 = vmatprep.subr.mxu0 %v128
    %1736 = vmatpush1.msra.mxu0 %v127
    %1737 = vmatprep.subr.mxu0 %v132
    %1738 = vmatpush1.msra.mxu0 %v131
    %1739 = vmatprep.subr.mxu0 %v136
    %1740 = vmatpush1.msra.mxu0 %v135
    %1741 = vmatprep.subr.mxu0 0.0
    %1742 = vmatpush1.msra.mxu0 0.0
    %1743 = vmatprep.subr.mxu0 0.0
    %1744 = vmatpush1.msra.mxu0 0.0
    %1745 = vmatprep.subr.mxu0 0.0
    %1746 = vmatpush1.msra.mxu0 0.0
    %1747 = vmatprep.subr.mxu0 0.0
    %1748 = vmatpush1.msra.mxu0 0.0
    %1749 = vmatprep.subr.mxu0 0.0
    %1750 = vmatpush1.msra.mxu0 0.0
    %1751 = vmatprep.subr.mxu0 0.0
    %1752 = vmatpush1.msra.mxu0 0.0
    %1753 = vmatprep.subr.mxu0 0.0
    %1754 = vmatpush1.msra.mxu0 0.0
    %1755 = vmatprep.subr.mxu0 0.0
    %1756 = vmatpush1.msra.mxu0 0.0
    %1757 = vmatprep.subr.mxu0 0.0
    %1758 = vmatpush1.msra.mxu0 0.0
    %1759 = vmatprep.subr.mxu0 0.0
    %1760 = vmatpush1.msra.mxu0 0.0
    %1761 = vmatprep.subr.mxu0 0.0
    %1762 = vmatpush1.msra.mxu0 0.0
    %1763 = vmatprep.subr.mxu0 0.0
    %1764 = vmatpush1.msra.mxu0 0.0
    %1765 = vmatprep.subr.mxu0 0.0
    %1766 = vmatpush1.msra.mxu0 0.0
    %1767 = vmatprep.subr.mxu0 0.0
    %1768 = vmatpush1.msra.mxu0 0.0
    %1769 = vmatprep.subr.mxu0 0.0
    %1770 = vmatpush1.msra.mxu0 0.0
    %1771 = vmatprep.subr.mxu0 0.0
    %1772 = vmatpush1.msra.mxu0 0.0
    %1773 = vmatprep.mubr.f32.mxu0 0.0
    %1774 = vmatmul.mubr.f32.gmra.mrb[0].mxu0 %v1627
    %v1775 = vpop.f32.mrb[0].mxu0
    %v1776 = vadd.f32 0.0, %v1775
    %v1777 = vpop.f32.mrb[0].mxu0
    %v1778 = vadd.f32 0.0, %v1777
    %1779 = vdwg.mxu0
    %v1784 = vcombine.low %v1705, %v1707
    %v1785 = vcombine.low %v1776, %v1778
    %v1787 = vunpack.c.l.s4 1966171168
    %v1788 = vunpack.c.0.s8 %v1787
    %v1789 = vlaneseq
    %v1790 = vshrl.u32 %v1789, 7
    %v1791 = vsub.s32 %v1788, %v1790
    %v1792 = vrot.slane %v1784, %v1791
    %v1794 = vunpack.c.l.s4 1966171168
    %v1795 = vunpack.c.0.s8 %v1794
    %v1796 = vlaneseq
    %v1797 = vshrl.u32 %v1796, 7
    %v1798 = vsub.s32 %v1795, %v1797
    %v1799 = vrot.slane %v1785, %v1798
    %v1800 = vcombine.low %v1792, %v1799
    %v1802 = vunpack.c.l.s4 1966171168
    %v1803 = vunpack.c.0.s8 %v1802
    %v1804 = vlaneseq
    %v1805 = vshrl.u32 %v1804, 7
    %v1806 = vsub.s32 %v1803, %v1805
    %v1807 = vrot.slane %v1800, %v1806
    %v1809 = vadd.f32 %v1637, %v1807
    %v1810 = vxor.u32 %v1809, 2147483648
    %v1811 = vmul.f32 %v1810, 1.442695
    %v1812 = vpow.pop %v1811
    %v1813 = vadd.f32 %v1812, 1.0
    %v1814 = vrcp.pop %v1813
    %v1815 = vmul.f32 1.0, %v1814
    %v1817 = vrot.slane %v1809, 1
    %v1819 = vxor.u32 %v1817, 2147483648
    %v1820 = vmul.f32 %v1819, 1.442695
    %v1821 = vpow.pop %v1820
    %v1822 = vadd.f32 %v1821, 1.0
    %v1823 = vrcp.pop %v1822
    %v1824 = vmul.f32 1.0, %v1823
    %v1825 = vrot.slane %v1809, 2
    %v1827 = vtanh.pop %v1825
    %v1828 = vrot.slane %v1809, 3
    %v1830 = vxor.u32 %v1828, 2147483648
    %v1831 = vmul.f32 %v1830, 1.442695
    %v1832 = vpow.pop %v1831
    %v1833 = vadd.f32 %v1832, 1.0
    %v1834 = vrcp.pop %v1833
    %v1835 = vmul.f32 1.0, %v1834
    %v1836 = vmul.f32 %v1824, %v1625
    %v1837 = vmul.f32 %v1815, %v1827
    %v1838 = vadd.f32 %v1836, %v1837
    %v1839 = vtanh.pop %v1838
    %v1840 = vmul.f32 %v1835, %v1839
    %v1841 = vld [vmem:[#allocation9] sm:$0xff]
    %v1842 = vld [vmem:[#allocation9 + $0x8] sm:$0xff]
    %v1843 = vld [vmem:[#allocation9 + $0x10] sm:$0xff]
    %v1844 = vld [vmem:[#allocation9 + $0x18] sm:$0xff]
    %v1845 = vld [vmem:[#allocation9 + $0x20] sm:$0xff]
    %v1846 = vld [vmem:[#allocation9 + $0x28] sm:$0xff]
    %v1847 = vld [vmem:[#allocation9 + $0x30] sm:$0xff]
    %v1848 = vld [vmem:[#allocation9 + $0x38] sm:$0xff]
    %v1849 = vld [vmem:[#allocation9 + $0x40] sm:$0xff]
    %v1850 = vld [vmem:[#allocation9 + $0x48] sm:$0xff]
    %v1851 = vld [vmem:[#allocation9 + $0x50] sm:$0xff]
    %v1852 = vld [vmem:[#allocation9 + $0x58] sm:$0xff]
    %v1853 = vld [vmem:[#allocation9 + $0x60] sm:$0xff]
    %v1854 = vld [vmem:[#allocation9 + $0x68] sm:$0xff]
    %v1855 = vld [vmem:[#allocation9 + $0x70] sm:$0xff]
    %v1856 = vld [vmem:[#allocation9 + $0x78] sm:$0xff]
    %v1857 = vld [vmem:[%s4] sm:$0x1]
    %1858 = vmatprep.subr.mxu0 0.0
    %1859 = vmatpush1.msra.mxu0 %v1841
    %1860 = vmatprep.subr.mxu0 0.0
    %1861 = vmatpush1.msra.mxu0 %v1842
    %1862 = vmatprep.subr.mxu0 0.0
    %1863 = vmatpush1.msra.mxu0 %v1843
    %1864 = vmatprep.subr.mxu0 0.0
    %1865 = vmatpush1.msra.mxu0 %v1844
    %1866 = vmatprep.subr.mxu0 0.0
    %1867 = vmatpush1.msra.mxu0 %v1845
    %1868 = vmatprep.subr.mxu0 0.0
    %1869 = vmatpush1.msra.mxu0 %v1846
    %1870 = vmatprep.subr.mxu0 0.0
    %1871 = vmatpush1.msra.mxu0 %v1847
    %1872 = vmatprep.subr.mxu0 0.0
    %1873 = vmatpush1.msra.mxu0 %v1848
    %1874 = vmatprep.subr.mxu0 0.0
    %1875 = vmatpush1.msra.mxu0 %v1849
    %1876 = vmatprep.subr.mxu0 0.0
    %1877 = vmatpush1.msra.mxu0 %v1850
    %1878 = vmatprep.subr.mxu0 0.0
    %1879 = vmatpush1.msra.mxu0 %v1851
    %1880 = vmatprep.subr.mxu0 0.0
    %1881 = vmatpush1.msra.mxu0 %v1852
    %1882 = vmatprep.subr.mxu0 0.0
    %1883 = vmatpush1.msra.mxu0 %v1853
    %1884 = vmatprep.subr.mxu0 0.0
    %1885 = vmatpush1.msra.mxu0 %v1854
    %1886 = vmatprep.subr.mxu0 0.0
    %1887 = vmatpush1.msra.mxu0 %v1855
    %1888 = vmatprep.subr.mxu0 0.0
    %1889 = vmatpush1.msra.mxu0 %v1856
    %1890 = vmatprep.subr.mxu0 0.0
    %1891 = vmatpush1.msra.mxu0 0.0
    %1892 = vmatprep.subr.mxu0 0.0
    %1893 = vmatpush1.msra.mxu0 0.0
    %1894 = vmatprep.subr.mxu0 0.0
    %1895 = vmatpush1.msra.mxu0 0.0
    %1896 = vmatprep.subr.mxu0 0.0
    %1897 = vmatpush1.msra.mxu0 0.0
    %1898 = vmatprep.subr.mxu0 0.0
    %1899 = vmatpush1.msra.mxu0 0.0
    %1900 = vmatprep.subr.mxu0 0.0
    %1901 = vmatpush1.msra.mxu0 0.0
    %1902 = vmatprep.subr.mxu0 0.0
    %1903 = vmatpush1.msra.mxu0 0.0
    %1904 = vmatprep.subr.mxu0 0.0
    %1905 = vmatpush1.msra.mxu0 0.0
    %1906 = vmatprep.subr.mxu0 0.0
    %1907 = vmatpush1.msra.mxu0 0.0
    %1908 = vmatprep.subr.mxu0 0.0
    %1909 = vmatpush1.msra.mxu0 0.0
    %1910 = vmatprep.subr.mxu0 0.0
    %1911 = vmatpush1.msra.mxu0 0.0
    %1912 = vmatprep.subr.mxu0 0.0
    %1913 = vmatpush1.msra.mxu0 0.0
    %1914 = vmatprep.subr.mxu0 0.0
    %1915 = vmatpush1.msra.mxu0 0.0
    %1916 = vmatprep.subr.mxu0 0.0
    %1917 = vmatpush1.msra.mxu0 0.0
    %1918 = vmatprep.subr.mxu0 0.0
    %1919 = vmatpush1.msra.mxu0 0.0
    %1920 = vmatprep.subr.mxu0 0.0
    %1921 = vmatpush1.msra.mxu0 0.0
    %1922 = vmatprep.mubr.f32.mxu0 0.0
    %1923 = vmatmul.mubr.f32.gmra.mrb[0].mxu0 %v1840
    %v1924 = vpop.f32.mrb[0].mxu0
    %v1925 = vadd.f32 %v1857, %v1924
    %v1926 = vpop.f32.mrb[0].mxu0
    %1927 = vdwg.mxu0
    %v1928 = vlaneseq
    %v1929 = vand.u32 %v1928, 127
    %vm1930 = vcmp.lt.s32.totalorder %v1929, 5
    %v1931 = vsel %vm1930, %v1925, -1e+30
    %vm1932 = vcmask 1040384
    %v1933 = vsel %vm1932, %v1931, -inf
    %1934 = vmax.xlane.f32.xlu0 %v1933
    %v1935 = vpop.xlane.xlu0 %1934
    %v1936 = vsub.f32 %v1931, %v1935
    %v1937 = vmul.f32 %v1936, 1.442695
    %v1938 = vpow.pop %v1937
    %v1939 = vsel %vm1932, %v1938, 0.0
    %1940 = vadd.xlane.f32.xlu0 %v1939
    %v1941 = vpop.xlane.xlu0 %1940
    %v1942 = vlog2.pop %v1941
    %v1943 = vmul.f32 %v1942, 0.6931472
    %v1944 = vsub.f32 %v1936, %v1943
    %1945 = vst [vmem:[#allocation10] sm:$0x1] %v1944
    // Predicated region
    $region38: #{tpu_custom_call.1} parent=1 // pred_check
      _
    $region39: #{tpu_custom_call.1} parent=1 // pred_check_branch
      %1947 = sbr.rel (0) target = $region41
    $region40: #{tpu_custom_call.1} parent=1 // pred_region
      %s1949 = ssub.s32 16, 16
      %1950 = vsyncadd [#allocation4], %s1949
      %s1952 = sshll.u32 [#allocation10], 4
      %s1953 = int_to_ptr.vmem [resolvable:$true] %s1952
      %1955 = dma.vmem_to_hbm [thread:$0]  %s1953, 16, %s5, [#allocation4]
    $region41: #{tpu_custom_call.1} parent=1 // pred_fallthru
      _
    // Predicated region
    $region42: #{tpu_custom_call.1} parent=1 // pred_check
      _
    $region43: #{tpu_custom_call.1} parent=1 // pred_check_branch
      %1957 = sbr.rel (0) target = $region45
    $region44: #{tpu_custom_call.1} parent=1 // pred_region
      %1958 = dma.done [#allocation4], 16
    $region45: #{tpu_custom_call.1} parent=1 // pred_fallthru
      _
    %1959 = vsyncpa [#allocation3], 1
    %1960 = vsyncpa [#allocation8], 1
    %1961 = vsyncpa [#allocation4], 1
    %1962 = vsyncpa [#allocation5], 1

</llo_original>
